<compile_context>
chip_gen: v5e
topology: v5e:2x2
jax: 0.10.0
libtpu: 0.0.40
codegen_flags: <defaults>
</compile_context>

<pallas_src>
import jax
import jax.numpy as jnp
from jax.experimental import pallas as pl
from jax.experimental.pallas import tpu as pltpu


def _embed_gather_kernel(ids_ref, pos_ref,      # scalar prefetch ids (SMEM)
                         wte_hbm, wpe_hbm,      # embedding tables, left in HBM
                         out_ref,               # (T, H) output block (VMEM)
                         wbuf, pbuf,            # (T, H) gather buffers (VMEM)
                         wsem, psem):           # per-row DMA semaphores
    T = out_ref.shape[0]
    base = pl.program_id(0) * T

    # Issue all 2*T row-gather DMAs up front so they overlap.
    # T is small and static -> this unrolls into scalar-side DMA issue only.
    for t in range(T):
        tok = ids_ref[base + t]
        pid = pos_ref[base + t]
        pltpu.make_async_copy(wte_hbm.at[tok], wbuf.at[t], wsem.at[t]).start()
        pltpu.make_async_copy(wpe_hbm.at[pid], pbuf.at[t], psem.at[t]).start()

    # Wait for all gathered rows.
    for t in range(T):
        pltpu.make_async_copy(wte_hbm.at[0], wbuf.at[t], wsem.at[t]).wait()
        pltpu.make_async_copy(wpe_hbm.at[0], pbuf.at[t], psem.at[t]).wait()

    # word_embedding + position_embedding, accumulated in f32 on the VPU.
    acc = wbuf[...].astype(jnp.float32) + pbuf[...].astype(jnp.float32)
    out_ref[...] = acc.astype(out_ref.dtype)


def embedding1d_forward(input_ids, word_table, pos_table,
                        position_ids=None, *, token_block=32):
    """x = word_embeddings(input_ids) + position_embeddings(position_ids)."""
    B, S = input_ids.shape
    V, H = word_table.shape
    L, Hp = pos_table.shape
    assert H == Hp, "word/position embedding hidden sizes must match"

    if position_ids is None:
        # Matches the torch module's default: arange(seq_length) per batch row.
        position_ids = jnp.broadcast_to(
            jnp.arange(S, dtype=jnp.int32)[None, :], (B, S))

    n_tok = B * S
    T = int(token_block)

    ids_flat = input_ids.reshape(n_tok).astype(jnp.int32)
    pos_flat = position_ids.reshape(n_tok).astype(jnp.int32)

    # Pad the token dim to a multiple of the block; padded slots gather row 0
    # (a valid row) and are sliced off afterwards, so odd B*S is fine.
    pad = (-n_tok) % T
    if pad:
        ids_flat = jnp.concatenate([ids_flat, jnp.zeros((pad,), jnp.int32)])
        pos_flat = jnp.concatenate([pos_flat, jnp.zeros((pad,), jnp.int32)])
    n_pad = n_tok + pad

    out = pl.pallas_call(
        _embed_gather_kernel,
        out_shape=jax.ShapeDtypeStruct((n_pad, H), word_table.dtype),
        grid_spec=pltpu.PrefetchScalarGridSpec(
            num_scalar_prefetch=2,                  # ids, position ids -> SMEM
            grid=(n_pad // T,),
            in_specs=[
                pl.BlockSpec(memory_space=pl.ANY),  # word table stays in HBM
                pl.BlockSpec(memory_space=pl.ANY),  # pos  table stays in HBM
            ],
            out_specs=pl.BlockSpec((T, H), lambda i, ids, pos: (i, 0)),
            scratch_shapes=[
                pltpu.VMEM((T, H), word_table.dtype),
                pltpu.VMEM((T, H), pos_table.dtype),
                pltpu.SemaphoreType.DMA((T,)),
                pltpu.SemaphoreType.DMA((T,)),
            ],
        ),
        compiler_params=pltpu.CompilerParams(
            dimension_semantics=("parallel",),      # shards across TCs on v7x
        ),
    )(ids_flat, pos_flat, word_table, pos_table)

    return out[:n_tok].reshape(B, S, H)


if __name__ == "__main__":
    # Small, deterministic config consistent with Embedding1D.__init__.
    hidden_size = 128
    vocab_size = 512
    max_seq_len = 32
    padding_idx = 0
    B, S = 2, 8

    key = jax.random.PRNGKey(0)
    k_w, k_p, k_ids = jax.random.split(key, 3)

    # nn.Embedding init ~ N(0,1); padding_idx row is zeroed at init.
    word_table = jax.random.normal(k_w, (vocab_size, hidden_size), jnp.float32)
    word_table = word_table.at[padding_idx].set(0.0)
    pos_table = jax.random.normal(k_p, (max_seq_len, hidden_size), jnp.float32)

    input_ids = jax.random.randint(k_ids, (B, S), 0, vocab_size, jnp.int32)

    # Default position_ids (arange) path.
    out = embedding1d_forward(input_ids, word_table, pos_table, token_block=8)
    out = jax.block_until_ready(out)

    pos_ids = jnp.broadcast_to(jnp.arange(S, dtype=jnp.int32)[None, :], (B, S))
    ref = word_table[input_ids] + pos_table[pos_ids]
    assert out.shape == (B, S, hidden_size)
    assert jnp.allclose(out, ref, atol=1e-5, rtol=1e-5)

    # Custom position_ids + token padding (B*S=16 padded to token_block=32).
    custom_pos = jnp.flip(pos_ids, axis=-1)
    out2 = embedding1d_forward(input_ids, word_table, pos_table,
                               position_ids=custom_pos, token_block=32)
    out2 = jax.block_until_ready(out2)
    ref2 = word_table[input_ids] + pos_table[custom_pos]
    assert jnp.allclose(out2, ref2, atol=1e-5, rtol=1e-5)

    print("KERNEL_OK")
</pallas_src>

<mosaic_0001>
module attributes {stable_mosaic.version = 11 : i64} {
  func.func @_embed_gather_kernel(%arg0: i32, %arg1: memref<16xi32, #tpu.memory_space<smem>>, %arg2: memref<16xi32, #tpu.memory_space<smem>>, %arg3: memref<512x128xf32, #tpu.memory_space<any>>, %arg4: memref<32x128xf32, #tpu.memory_space<any>>, %arg5: memref<8x128xf32, #tpu.memory_space<vmem>>, %arg6: memref<8x128xf32, #tpu.memory_space<vmem>>, %arg7: memref<8x128xf32, #tpu.memory_space<vmem>>, %arg8: memref<8x!tpu.dma_semaphore, #tpu.memory_space<semaphore_mem>>, %arg9: memref<8x!tpu.dma_semaphore, #tpu.memory_space<semaphore_mem>>) attributes {dimension_semantics = [#tpu.dimension_semantics<parallel>], iteration_bounds = array<i64: 2>, scalar_prefetch = 2 : i64, scratch_operands = 4 : i64, tpu.core_type = #tpu.core_type<tc>, window_params = [{}, {}, {transform_indices = @transform_2, window_bounds = array<i64: 8, 128>}]} {
    %c8_i32 = arith.constant 8 : i32
    %0 = arith.muli %arg0, %c8_i32 : i32
    %c0_i32 = arith.constant 0 : i32
    %1 = arith.addi %0, %c0_i32 : i32
    %2 = arith.index_cast %1 : i32 to index
    %3 = memref.load %arg1[%2] : memref<16xi32, #tpu.memory_space<smem>>
    %c0_i32_0 = arith.constant 0 : i32
    %4 = arith.addi %0, %c0_i32_0 : i32
    %5 = arith.index_cast %4 : i32 to index
    %6 = memref.load %arg2[%5] : memref<16xi32, #tpu.memory_space<smem>>
    %c0_i32_1 = arith.constant 0 : i32
    %c0_i32_2 = arith.constant 0 : i32
    %c0_i32_3 = arith.constant 0 : i32
    %7 = tpu.memref_slice %arg3[%3, %c0_i32_3] : memref<512x128xf32, #tpu.memory_space<any>> -> memref<1x128xf32, #tpu.memory_space<any>>
    %8 = tpu.memref_squeeze %7 : memref<1x128xf32, #tpu.memory_space<any>> -> memref<128xf32, #tpu.memory_space<any>>
    %c0_i32_4 = arith.constant 0 : i32
    %9 = tpu.memref_slice %arg6[%c0_i32_1, %c0_i32_4] : memref<8x128xf32, #tpu.memory_space<vmem>> -> memref<1x128xf32, #tpu.memory_space<vmem>>
    %10 = tpu.memref_squeeze %9 : memref<1x128xf32, #tpu.memory_space<vmem>> -> memref<128xf32, #tpu.memory_space<vmem>>
    %11 = tpu.memref_slice %arg8[%c0_i32_2] : memref<8x!tpu.dma_semaphore, #tpu.memory_space<semaphore_mem>> -> memref<1x!tpu.dma_semaphore, #tpu.memory_space<semaphore_mem>>
    %12 = tpu.memref_squeeze %11 : memref<1x!tpu.dma_semaphore, #tpu.memory_space<semaphore_mem>> -> memref<!tpu.dma_semaphore, #tpu.memory_space<semaphore_mem>>
    tpu.enqueue_dma source(%8 : memref<128xf32, #tpu.memory_space<any>>) target(%10 : memref<128xf32, #tpu.memory_space<vmem>>) target_semaphore(%12 : memref<!tpu.dma_semaphore, #tpu.memory_space<semaphore_mem>>)
    %c0_i32_5 = arith.constant 0 : i32
    %c0_i32_6 = arith.constant 0 : i32
    %c0_i32_7 = arith.constant 0 : i32
    %13 = tpu.memref_slice %arg4[%6, %c0_i32_7] : memref<32x128xf32, #tpu.memory_space<any>> -> memref<1x128xf32, #tpu.memory_space<any>>
    %14 = tpu.memref_squeeze %13 : memref<1x128xf32, #tpu.memory_space<any>> -> memref<128xf32, #tpu.memory_space<any>>
    %c0_i32_8 = arith.constant 0 : i32
    %15 = tpu.memref_slice %arg7[%c0_i32_5, %c0_i32_8] : memref<8x128xf32, #tpu.memory_space<vmem>> -> memref<1x128xf32, #tpu.memory_space<vmem>>
    %16 = tpu.memref_squeeze %15 : memref<1x128xf32, #tpu.memory_space<vmem>> -> memref<128xf32, #tpu.memory_space<vmem>>
    %17 = tpu.memref_slice %arg9[%c0_i32_6] : memref<8x!tpu.dma_semaphore, #tpu.memory_space<semaphore_mem>> -> memref<1x!tpu.dma_semaphore, #tpu.memory_space<semaphore_mem>>
    %18 = tpu.memref_squeeze %17 : memref<1x!tpu.dma_semaphore, #tpu.memory_space<semaphore_mem>> -> memref<!tpu.dma_semaphore, #tpu.memory_space<semaphore_mem>>
    tpu.enqueue_dma source(%14 : memref<128xf32, #tpu.memory_space<any>>) target(%16 : memref<128xf32, #tpu.memory_space<vmem>>) target_semaphore(%18 : memref<!tpu.dma_semaphore, #tpu.memory_space<semaphore_mem>>)
    %c1_i32 = arith.constant 1 : i32
    %19 = arith.addi %0, %c1_i32 : i32
    %20 = arith.index_cast %19 : i32 to index
    %21 = memref.load %arg1[%20] : memref<16xi32, #tpu.memory_space<smem>>
    %c1_i32_9 = arith.constant 1 : i32
    %22 = arith.addi %0, %c1_i32_9 : i32
    %23 = arith.index_cast %22 : i32 to index
    %24 = memref.load %arg2[%23] : memref<16xi32, #tpu.memory_space<smem>>
    %c1_i32_10 = arith.constant 1 : i32
    %c1_i32_11 = arith.constant 1 : i32
    %c0_i32_12 = arith.constant 0 : i32
    %25 = tpu.memref_slice %arg3[%21, %c0_i32_12] : memref<512x128xf32, #tpu.memory_space<any>> -> memref<1x128xf32, #tpu.memory_space<any>>
    %26 = tpu.memref_squeeze %25 : memref<1x128xf32, #tpu.memory_space<any>> -> memref<128xf32, #tpu.memory_space<any>>
    %c0_i32_13 = arith.constant 0 : i32
    %27 = tpu.memref_slice %arg6[%c1_i32_10, %c0_i32_13] : memref<8x128xf32, #tpu.memory_space<vmem>> -> memref<1x128xf32, #tpu.memory_space<vmem>>
    %28 = tpu.memref_squeeze %27 : memref<1x128xf32, #tpu.memory_space<vmem>> -> memref<128xf32, #tpu.memory_space<vmem>>
    %29 = tpu.memref_slice %arg8[%c1_i32_11] : memref<8x!tpu.dma_semaphore, #tpu.memory_space<semaphore_mem>> -> memref<1x!tpu.dma_semaphore, #tpu.memory_space<semaphore_mem>>
    %30 = tpu.memref_squeeze %29 : memref<1x!tpu.dma_semaphore, #tpu.memory_space<semaphore_mem>> -> memref<!tpu.dma_semaphore, #tpu.memory_space<semaphore_mem>>
    tpu.enqueue_dma source(%26 : memref<128xf32, #tpu.memory_space<any>>) target(%28 : memref<128xf32, #tpu.memory_space<vmem>>) target_semaphore(%30 : memref<!tpu.dma_semaphore, #tpu.memory_space<semaphore_mem>>)
    %c1_i32_14 = arith.constant 1 : i32
    %c1_i32_15 = arith.constant 1 : i32
    %c0_i32_16 = arith.constant 0 : i32
    %31 = tpu.memref_slice %arg4[%24, %c0_i32_16] : memref<32x128xf32, #tpu.memory_space<any>> -> memref<1x128xf32, #tpu.memory_space<any>>
    %32 = tpu.memref_squeeze %31 : memref<1x128xf32, #tpu.memory_space<any>> -> memref<128xf32, #tpu.memory_space<any>>
    %c0_i32_17 = arith.constant 0 : i32
    %33 = tpu.memref_slice %arg7[%c1_i32_14, %c0_i32_17] : memref<8x128xf32, #tpu.memory_space<vmem>> -> memref<1x128xf32, #tpu.memory_space<vmem>>
    %34 = tpu.memref_squeeze %33 : memref<1x128xf32, #tpu.memory_space<vmem>> -> memref<128xf32, #tpu.memory_space<vmem>>
    %35 = tpu.memref_slice %arg9[%c1_i32_15] : memref<8x!tpu.dma_semaphore, #tpu.memory_space<semaphore_mem>> -> memref<1x!tpu.dma_semaphore, #tpu.memory_space<semaphore_mem>>
    %36 = tpu.memref_squeeze %35 : memref<1x!tpu.dma_semaphore, #tpu.memory_space<semaphore_mem>> -> memref<!tpu.dma_semaphore, #tpu.memory_space<semaphore_mem>>
    tpu.enqueue_dma source(%32 : memref<128xf32, #tpu.memory_space<any>>) target(%34 : memref<128xf32, #tpu.memory_space<vmem>>) target_semaphore(%36 : memref<!tpu.dma_semaphore, #tpu.memory_space<semaphore_mem>>)
    %c2_i32 = arith.constant 2 : i32
    %37 = arith.addi %0, %c2_i32 : i32
    %38 = arith.index_cast %37 : i32 to index
    %39 = memref.load %arg1[%38] : memref<16xi32, #tpu.memory_space<smem>>
    %c2_i32_18 = arith.constant 2 : i32
    %40 = arith.addi %0, %c2_i32_18 : i32
    %41 = arith.index_cast %40 : i32 to index
    %42 = memref.load %arg2[%41] : memref<16xi32, #tpu.memory_space<smem>>
    %c2_i32_19 = arith.constant 2 : i32
    %c2_i32_20 = arith.constant 2 : i32
    %c0_i32_21 = arith.constant 0 : i32
    %43 = tpu.memref_slice %arg3[%39, %c0_i32_21] : memref<512x128xf32, #tpu.memory_space<any>> -> memref<1x128xf32, #tpu.memory_space<any>>
    %44 = tpu.memref_squeeze %43 : memref<1x128xf32, #tpu.memory_space<any>> -> memref<128xf32, #tpu.memory_space<any>>
    %c0_i32_22 = arith.constant 0 : i32
    %45 = tpu.memref_slice %arg6[%c2_i32_19, %c0_i32_22] : memref<8x128xf32, #tpu.memory_space<vmem>> -> memref<1x128xf32, #tpu.memory_space<vmem>>
    %46 = tpu.memref_squeeze %45 : memref<1x128xf32, #tpu.memory_space<vmem>> -> memref<128xf32, #tpu.memory_space<vmem>>
    %47 = tpu.memref_slice %arg8[%c2_i32_20] : memref<8x!tpu.dma_semaphore, #tpu.memory_space<semaphore_mem>> -> memref<1x!tpu.dma_semaphore, #tpu.memory_space<semaphore_mem>>
    %48 = tpu.memref_squeeze %47 : memref<1x!tpu.dma_semaphore, #tpu.memory_space<semaphore_mem>> -> memref<!tpu.dma_semaphore, #tpu.memory_space<semaphore_mem>>
    tpu.enqueue_dma source(%44 : memref<128xf32, #tpu.memory_space<any>>) target(%46 : memref<128xf32, #tpu.memory_space<vmem>>) target_semaphore(%48 : memref<!tpu.dma_semaphore, #tpu.memory_space<semaphore_mem>>)
    %c2_i32_23 = arith.constant 2 : i32
    %c2_i32_24 = arith.constant 2 : i32
    %c0_i32_25 = arith.constant 0 : i32
    %49 = tpu.memref_slice %arg4[%42, %c0_i32_25] : memref<32x128xf32, #tpu.memory_space<any>> -> memref<1x128xf32, #tpu.memory_space<any>>
    %50 = tpu.memref_squeeze %49 : memref<1x128xf32, #tpu.memory_space<any>> -> memref<128xf32, #tpu.memory_space<any>>
    %c0_i32_26 = arith.constant 0 : i32
    %51 = tpu.memref_slice %arg7[%c2_i32_23, %c0_i32_26] : memref<8x128xf32, #tpu.memory_space<vmem>> -> memref<1x128xf32, #tpu.memory_space<vmem>>
    %52 = tpu.memref_squeeze %51 : memref<1x128xf32, #tpu.memory_space<vmem>> -> memref<128xf32, #tpu.memory_space<vmem>>
    %53 = tpu.memref_slice %arg9[%c2_i32_24] : memref<8x!tpu.dma_semaphore, #tpu.memory_space<semaphore_mem>> -> memref<1x!tpu.dma_semaphore, #tpu.memory_space<semaphore_mem>>
    %54 = tpu.memref_squeeze %53 : memref<1x!tpu.dma_semaphore, #tpu.memory_space<semaphore_mem>> -> memref<!tpu.dma_semaphore, #tpu.memory_space<semaphore_mem>>
    tpu.enqueue_dma source(%50 : memref<128xf32, #tpu.memory_space<any>>) target(%52 : memref<128xf32, #tpu.memory_space<vmem>>) target_semaphore(%54 : memref<!tpu.dma_semaphore, #tpu.memory_space<semaphore_mem>>)
    %c3_i32 = arith.constant 3 : i32
    %55 = arith.addi %0, %c3_i32 : i32
    %56 = arith.index_cast %55 : i32 to index
    %57 = memref.load %arg1[%56] : memref<16xi32, #tpu.memory_space<smem>>
    %c3_i32_27 = arith.constant 3 : i32
    %58 = arith.addi %0, %c3_i32_27 : i32
    %59 = arith.index_cast %58 : i32 to index
    %60 = memref.load %arg2[%59] : memref<16xi32, #tpu.memory_space<smem>>
    %c3_i32_28 = arith.constant 3 : i32
    %c3_i32_29 = arith.constant 3 : i32
    %c0_i32_30 = arith.constant 0 : i32
    %61 = tpu.memref_slice %arg3[%57, %c0_i32_30] : memref<512x128xf32, #tpu.memory_space<any>> -> memref<1x128xf32, #tpu.memory_space<any>>
    %62 = tpu.memref_squeeze %61 : memref<1x128xf32, #tpu.memory_space<any>> -> memref<128xf32, #tpu.memory_space<any>>
    %c0_i32_31 = arith.constant 0 : i32
    %63 = tpu.memref_slice %arg6[%c3_i32_28, %c0_i32_31] : memref<8x128xf32, #tpu.memory_space<vmem>> -> memref<1x128xf32, #tpu.memory_space<vmem>>
    %64 = tpu.memref_squeeze %63 : memref<1x128xf32, #tpu.memory_space<vmem>> -> memref<128xf32, #tpu.memory_space<vmem>>
    %65 = tpu.memref_slice %arg8[%c3_i32_29] : memref<8x!tpu.dma_semaphore, #tpu.memory_space<semaphore_mem>> -> memref<1x!tpu.dma_semaphore, #tpu.memory_space<semaphore_mem>>
    %66 = tpu.memref_squeeze %65 : memref<1x!tpu.dma_semaphore, #tpu.memory_space<semaphore_mem>> -> memref<!tpu.dma_semaphore, #tpu.memory_space<semaphore_mem>>
    tpu.enqueue_dma source(%62 : memref<128xf32, #tpu.memory_space<any>>) target(%64 : memref<128xf32, #tpu.memory_space<vmem>>) target_semaphore(%66 : memref<!tpu.dma_semaphore, #tpu.memory_space<semaphore_mem>>)
    %c3_i32_32 = arith.constant 3 : i32
    %c3_i32_33 = arith.constant 3 : i32
    %c0_i32_34 = arith.constant 0 : i32
    %67 = tpu.memref_slice %arg4[%60, %c0_i32_34] : memref<32x128xf32, #tpu.memory_space<any>> -> memref<1x128xf32, #tpu.memory_space<any>>
    %68 = tpu.memref_squeeze %67 : memref<1x128xf32, #tpu.memory_space<any>> -> memref<128xf32, #tpu.memory_space<any>>
    %c0_i32_35 = arith.constant 0 : i32
    %69 = tpu.memref_slice %arg7[%c3_i32_32, %c0_i32_35] : memref<8x128xf32, #tpu.memory_space<vmem>> -> memref<1x128xf32, #tpu.memory_space<vmem>>
    %70 = tpu.memref_squeeze %69 : memref<1x128xf32, #tpu.memory_space<vmem>> -> memref<128xf32, #tpu.memory_space<vmem>>
    %71 = tpu.memref_slice %arg9[%c3_i32_33] : memref<8x!tpu.dma_semaphore, #tpu.memory_space<semaphore_mem>> -> memref<1x!tpu.dma_semaphore, #tpu.memory_space<semaphore_mem>>
    %72 = tpu.memref_squeeze %71 : memref<1x!tpu.dma_semaphore, #tpu.memory_space<semaphore_mem>> -> memref<!tpu.dma_semaphore, #tpu.memory_space<semaphore_mem>>
    tpu.enqueue_dma source(%68 : memref<128xf32, #tpu.memory_space<any>>) target(%70 : memref<128xf32, #tpu.memory_space<vmem>>) target_semaphore(%72 : memref<!tpu.dma_semaphore, #tpu.memory_space<semaphore_mem>>)
    %c4_i32 = arith.constant 4 : i32
    %73 = arith.addi %0, %c4_i32 : i32
    %74 = arith.index_cast %73 : i32 to index
    %75 = memref.load %arg1[%74] : memref<16xi32, #tpu.memory_space<smem>>
    %c4_i32_36 = arith.constant 4 : i32
    %76 = arith.addi %0, %c4_i32_36 : i32
    %77 = arith.index_cast %76 : i32 to index
    %78 = memref.load %arg2[%77] : memref<16xi32, #tpu.memory_space<smem>>
    %c4_i32_37 = arith.constant 4 : i32
    %c4_i32_38 = arith.constant 4 : i32
    %c0_i32_39 = arith.constant 0 : i32
    %79 = tpu.memref_slice %arg3[%75, %c0_i32_39] : memref<512x128xf32, #tpu.memory_space<any>> -> memref<1x128xf32, #tpu.memory_space<any>>
    %80 = tpu.memref_squeeze %79 : memref<1x128xf32, #tpu.memory_space<any>> -> memref<128xf32, #tpu.memory_space<any>>
    %c0_i32_40 = arith.constant 0 : i32
    %81 = tpu.memref_slice %arg6[%c4_i32_37, %c0_i32_40] : memref<8x128xf32, #tpu.memory_space<vmem>> -> memref<1x128xf32, #tpu.memory_space<vmem>>
    %82 = tpu.memref_squeeze %81 : memref<1x128xf32, #tpu.memory_space<vmem>> -> memref<128xf32, #tpu.memory_space<vmem>>
    %83 = tpu.memref_slice %arg8[%c4_i32_38] : memref<8x!tpu.dma_semaphore, #tpu.memory_space<semaphore_mem>> -> memref<1x!tpu.dma_semaphore, #tpu.memory_space<semaphore_mem>>
    %84 = tpu.memref_squeeze %83 : memref<1x!tpu.dma_semaphore, #tpu.memory_space<semaphore_mem>> -> memref<!tpu.dma_semaphore, #tpu.memory_space<semaphore_mem>>
    tpu.enqueue_dma source(%80 : memref<128xf32, #tpu.memory_space<any>>) target(%82 : memref<128xf32, #tpu.memory_space<vmem>>) target_semaphore(%84 : memref<!tpu.dma_semaphore, #tpu.memory_space<semaphore_mem>>)
    %c4_i32_41 = arith.constant 4 : i32
    %c4_i32_42 = arith.constant 4 : i32
    %c0_i32_43 = arith.constant 0 : i32
    %85 = tpu.memref_slice %arg4[%78, %c0_i32_43] : memref<32x128xf32, #tpu.memory_space<any>> -> memref<1x128xf32, #tpu.memory_space<any>>
    %86 = tpu.memref_squeeze %85 : memref<1x128xf32, #tpu.memory_space<any>> -> memref<128xf32, #tpu.memory_space<any>>
    %c0_i32_44 = arith.constant 0 : i32
    %87 = tpu.memref_slice %arg7[%c4_i32_41, %c0_i32_44] : memref<8x128xf32, #tpu.memory_space<vmem>> -> memref<1x128xf32, #tpu.memory_space<vmem>>
    %88 = tpu.memref_squeeze %87 : memref<1x128xf32, #tpu.memory_space<vmem>> -> memref<128xf32, #tpu.memory_space<vmem>>
    %89 = tpu.memref_slice %arg9[%c4_i32_42] : memref<8x!tpu.dma_semaphore, #tpu.memory_space<semaphore_mem>> -> memref<1x!tpu.dma_semaphore, #tpu.memory_space<semaphore_mem>>
    %90 = tpu.memref_squeeze %89 : memref<1x!tpu.dma_semaphore, #tpu.memory_space<semaphore_mem>> -> memref<!tpu.dma_semaphore, #tpu.memory_space<semaphore_mem>>
    tpu.enqueue_dma source(%86 : memref<128xf32, #tpu.memory_space<any>>) target(%88 : memref<128xf32, #tpu.memory_space<vmem>>) target_semaphore(%90 : memref<!tpu.dma_semaphore, #tpu.memory_space<semaphore_mem>>)
    %c5_i32 = arith.constant 5 : i32
    %91 = arith.addi %0, %c5_i32 : i32
    %92 = arith.index_cast %91 : i32 to index
    %93 = memref.load %arg1[%92] : memref<16xi32, #tpu.memory_space<smem>>
    %c5_i32_45 = arith.constant 5 : i32
    %94 = arith.addi %0, %c5_i32_45 : i32
    %95 = arith.index_cast %94 : i32 to index
    %96 = memref.load %arg2[%95] : memref<16xi32, #tpu.memory_space<smem>>
    %c5_i32_46 = arith.constant 5 : i32
    %c5_i32_47 = arith.constant 5 : i32
    %c0_i32_48 = arith.constant 0 : i32
    %97 = tpu.memref_slice %arg3[%93, %c0_i32_48] : memref<512x128xf32, #tpu.memory_space<any>> -> memref<1x128xf32, #tpu.memory_space<any>>
    %98 = tpu.memref_squeeze %97 : memref<1x128xf32, #tpu.memory_space<any>> -> memref<128xf32, #tpu.memory_space<any>>
    %c0_i32_49 = arith.constant 0 : i32
    %99 = tpu.memref_slice %arg6[%c5_i32_46, %c0_i32_49] : memref<8x128xf32, #tpu.memory_space<vmem>> -> memref<1x128xf32, #tpu.memory_space<vmem>>
    %100 = tpu.memref_squeeze %99 : memref<1x128xf32, #tpu.memory_space<vmem>> -> memref<128xf32, #tpu.memory_space<vmem>>
    %101 = tpu.memref_slice %arg8[%c5_i32_47] : memref<8x!tpu.dma_semaphore, #tpu.memory_space<semaphore_mem>> -> memref<1x!tpu.dma_semaphore, #tpu.memory_space<semaphore_mem>>
    %102 = tpu.memref_squeeze %101 : memref<1x!tpu.dma_semaphore, #tpu.memory_space<semaphore_mem>> -> memref<!tpu.dma_semaphore, #tpu.memory_space<semaphore_mem>>
    tpu.enqueue_dma source(%98 : memref<128xf32, #tpu.memory_space<any>>) target(%100 : memref<128xf32, #tpu.memory_space<vmem>>) target_semaphore(%102 : memref<!tpu.dma_semaphore, #tpu.memory_space<semaphore_mem>>)
    %c5_i32_50 = arith.constant 5 : i32
    %c5_i32_51 = arith.constant 5 : i32
    %c0_i32_52 = arith.constant 0 : i32
    %103 = tpu.memref_slice %arg4[%96, %c0_i32_52] : memref<32x128xf32, #tpu.memory_space<any>> -> memref<1x128xf32, #tpu.memory_space<any>>
    %104 = tpu.memref_squeeze %103 : memref<1x128xf32, #tpu.memory_space<any>> -> memref<128xf32, #tpu.memory_space<any>>
    %c0_i32_53 = arith.constant 0 : i32
    %105 = tpu.memref_slice %arg7[%c5_i32_50, %c0_i32_53] : memref<8x128xf32, #tpu.memory_space<vmem>> -> memref<1x128xf32, #tpu.memory_space<vmem>>
    %106 = tpu.memref_squeeze %105 : memref<1x128xf32, #tpu.memory_space<vmem>> -> memref<128xf32, #tpu.memory_space<vmem>>
    %107 = tpu.memref_slice %arg9[%c5_i32_51] : memref<8x!tpu.dma_semaphore, #tpu.memory_space<semaphore_mem>> -> memref<1x!tpu.dma_semaphore, #tpu.memory_space<semaphore_mem>>
    %108 = tpu.memref_squeeze %107 : memref<1x!tpu.dma_semaphore, #tpu.memory_space<semaphore_mem>> -> memref<!tpu.dma_semaphore, #tpu.memory_space<semaphore_mem>>
    tpu.enqueue_dma source(%104 : memref<128xf32, #tpu.memory_space<any>>) target(%106 : memref<128xf32, #tpu.memory_space<vmem>>) target_semaphore(%108 : memref<!tpu.dma_semaphore, #tpu.memory_space<semaphore_mem>>)
    %c6_i32 = arith.constant 6 : i32
    %109 = arith.addi %0, %c6_i32 : i32
    %110 = arith.index_cast %109 : i32 to index
    %111 = memref.load %arg1[%110] : memref<16xi32, #tpu.memory_space<smem>>
    %c6_i32_54 = arith.constant 6 : i32
    %112 = arith.addi %0, %c6_i32_54 : i32
    %113 = arith.index_cast %112 : i32 to index
    %114 = memref.load %arg2[%113] : memref<16xi32, #tpu.memory_space<smem>>
    %c6_i32_55 = arith.constant 6 : i32
    %c6_i32_56 = arith.constant 6 : i32
    %c0_i32_57 = arith.constant 0 : i32
    %115 = tpu.memref_slice %arg3[%111, %c0_i32_57] : memref<512x128xf32, #tpu.memory_space<any>> -> memref<1x128xf32, #tpu.memory_space<any>>
    %116 = tpu.memref_squeeze %115 : memref<1x128xf32, #tpu.memory_space<any>> -> memref<128xf32, #tpu.memory_space<any>>
    %c0_i32_58 = arith.constant 0 : i32
    %117 = tpu.memref_slice %arg6[%c6_i32_55, %c0_i32_58] : memref<8x128xf32, #tpu.memory_space<vmem>> -> memref<1x128xf32, #tpu.memory_space<vmem>>
    %118 = tpu.memref_squeeze %117 : memref<1x128xf32, #tpu.memory_space<vmem>> -> memref<128xf32, #tpu.memory_space<vmem>>
    %119 = tpu.memref_slice %arg8[%c6_i32_56] : memref<8x!tpu.dma_semaphore, #tpu.memory_space<semaphore_mem>> -> memref<1x!tpu.dma_semaphore, #tpu.memory_space<semaphore_mem>>
    %120 = tpu.memref_squeeze %119 : memref<1x!tpu.dma_semaphore, #tpu.memory_space<semaphore_mem>> -> memref<!tpu.dma_semaphore, #tpu.memory_space<semaphore_mem>>
    tpu.enqueue_dma source(%116 : memref<128xf32, #tpu.memory_space<any>>) target(%118 : memref<128xf32, #tpu.memory_space<vmem>>) target_semaphore(%120 : memref<!tpu.dma_semaphore, #tpu.memory_space<semaphore_mem>>)
    %c6_i32_59 = arith.constant 6 : i32
    %c6_i32_60 = arith.constant 6 : i32
    %c0_i32_61 = arith.constant 0 : i32
    %121 = tpu.memref_slice %arg4[%114, %c0_i32_61] : memref<32x128xf32, #tpu.memory_space<any>> -> memref<1x128xf32, #tpu.memory_space<any>>
    %122 = tpu.memref_squeeze %121 : memref<1x128xf32, #tpu.memory_space<any>> -> memref<128xf32, #tpu.memory_space<any>>
    %c0_i32_62 = arith.constant 0 : i32
    %123 = tpu.memref_slice %arg7[%c6_i32_59, %c0_i32_62] : memref<8x128xf32, #tpu.memory_space<vmem>> -> memref<1x128xf32, #tpu.memory_space<vmem>>
    %124 = tpu.memref_squeeze %123 : memref<1x128xf32, #tpu.memory_space<vmem>> -> memref<128xf32, #tpu.memory_space<vmem>>
    %125 = tpu.memref_slice %arg9[%c6_i32_60] : memref<8x!tpu.dma_semaphore, #tpu.memory_space<semaphore_mem>> -> memref<1x!tpu.dma_semaphore, #tpu.memory_space<semaphore_mem>>
    %126 = tpu.memref_squeeze %125 : memref<1x!tpu.dma_semaphore, #tpu.memory_space<semaphore_mem>> -> memref<!tpu.dma_semaphore, #tpu.memory_space<semaphore_mem>>
    tpu.enqueue_dma source(%122 : memref<128xf32, #tpu.memory_space<any>>) target(%124 : memref<128xf32, #tpu.memory_space<vmem>>) target_semaphore(%126 : memref<!tpu.dma_semaphore, #tpu.memory_space<semaphore_mem>>)
    %c7_i32 = arith.constant 7 : i32
    %127 = arith.addi %0, %c7_i32 : i32
    %128 = arith.index_cast %127 : i32 to index
    %129 = memref.load %arg1[%128] : memref<16xi32, #tpu.memory_space<smem>>
    %c7_i32_63 = arith.constant 7 : i32
    %130 = arith.addi %0, %c7_i32_63 : i32
    %131 = arith.index_cast %130 : i32 to index
    %132 = memref.load %arg2[%131] : memref<16xi32, #tpu.memory_space<smem>>
    %c7_i32_64 = arith.constant 7 : i32
    %c7_i32_65 = arith.constant 7 : i32
    %c0_i32_66 = arith.constant 0 : i32
    %133 = tpu.memref_slice %arg3[%129, %c0_i32_66] : memref<512x128xf32, #tpu.memory_space<any>> -> memref<1x128xf32, #tpu.memory_space<any>>
    %134 = tpu.memref_squeeze %133 : memref<1x128xf32, #tpu.memory_space<any>> -> memref<128xf32, #tpu.memory_space<any>>
    %c0_i32_67 = arith.constant 0 : i32
    %135 = tpu.memref_slice %arg6[%c7_i32_64, %c0_i32_67] : memref<8x128xf32, #tpu.memory_space<vmem>> -> memref<1x128xf32, #tpu.memory_space<vmem>>
    %136 = tpu.memref_squeeze %135 : memref<1x128xf32, #tpu.memory_space<vmem>> -> memref<128xf32, #tpu.memory_space<vmem>>
    %137 = tpu.memref_slice %arg8[%c7_i32_65] : memref<8x!tpu.dma_semaphore, #tpu.memory_space<semaphore_mem>> -> memref<1x!tpu.dma_semaphore, #tpu.memory_space<semaphore_mem>>
    %138 = tpu.memref_squeeze %137 : memref<1x!tpu.dma_semaphore, #tpu.memory_space<semaphore_mem>> -> memref<!tpu.dma_semaphore, #tpu.memory_space<semaphore_mem>>
    tpu.enqueue_dma source(%134 : memref<128xf32, #tpu.memory_space<any>>) target(%136 : memref<128xf32, #tpu.memory_space<vmem>>) target_semaphore(%138 : memref<!tpu.dma_semaphore, #tpu.memory_space<semaphore_mem>>)
    %c7_i32_68 = arith.constant 7 : i32
    %c7_i32_69 = arith.constant 7 : i32
    %c0_i32_70 = arith.constant 0 : i32
    %139 = tpu.memref_slice %arg4[%132, %c0_i32_70] : memref<32x128xf32, #tpu.memory_space<any>> -> memref<1x128xf32, #tpu.memory_space<any>>
    %140 = tpu.memref_squeeze %139 : memref<1x128xf32, #tpu.memory_space<any>> -> memref<128xf32, #tpu.memory_space<any>>
    %c0_i32_71 = arith.constant 0 : i32
    %141 = tpu.memref_slice %arg7[%c7_i32_68, %c0_i32_71] : memref<8x128xf32, #tpu.memory_space<vmem>> -> memref<1x128xf32, #tpu.memory_space<vmem>>
    %142 = tpu.memref_squeeze %141 : memref<1x128xf32, #tpu.memory_space<vmem>> -> memref<128xf32, #tpu.memory_space<vmem>>
    %143 = tpu.memref_slice %arg9[%c7_i32_69] : memref<8x!tpu.dma_semaphore, #tpu.memory_space<semaphore_mem>> -> memref<1x!tpu.dma_semaphore, #tpu.memory_space<semaphore_mem>>
    %144 = tpu.memref_squeeze %143 : memref<1x!tpu.dma_semaphore, #tpu.memory_space<semaphore_mem>> -> memref<!tpu.dma_semaphore, #tpu.memory_space<semaphore_mem>>
    tpu.enqueue_dma source(%140 : memref<128xf32, #tpu.memory_space<any>>) target(%142 : memref<128xf32, #tpu.memory_space<vmem>>) target_semaphore(%144 : memref<!tpu.dma_semaphore, #tpu.memory_space<semaphore_mem>>)
    %c0_i32_72 = arith.constant 0 : i32
    %c0_i32_73 = arith.constant 0 : i32
    %c0_i32_74 = arith.constant 0 : i32
    %c0_i32_75 = arith.constant 0 : i32
    %145 = tpu.memref_slice %arg3[%c0_i32_72, %c0_i32_75] : memref<512x128xf32, #tpu.memory_space<any>> -> memref<1x128xf32, #tpu.memory_space<any>>
    %146 = tpu.memref_squeeze %145 : memref<1x128xf32, #tpu.memory_space<any>> -> memref<128xf32, #tpu.memory_space<any>>
    %c0_i32_76 = arith.constant 0 : i32
    %147 = tpu.memref_slice %arg6[%c0_i32_73, %c0_i32_76] : memref<8x128xf32, #tpu.memory_space<vmem>> -> memref<1x128xf32, #tpu.memory_space<vmem>>
    %148 = tpu.memref_squeeze %147 : memref<1x128xf32, #tpu.memory_space<vmem>> -> memref<128xf32, #tpu.memory_space<vmem>>
    %149 = tpu.memref_slice %arg8[%c0_i32_74] : memref<8x!tpu.dma_semaphore, #tpu.memory_space<semaphore_mem>> -> memref<1x!tpu.dma_semaphore, #tpu.memory_space<semaphore_mem>>
    %150 = tpu.memref_squeeze %149 : memref<1x!tpu.dma_semaphore, #tpu.memory_space<semaphore_mem>> -> memref<!tpu.dma_semaphore, #tpu.memory_space<semaphore_mem>>
    tpu.wait_dma2 semaphore(%150 : memref<!tpu.dma_semaphore, #tpu.memory_space<semaphore_mem>>) src(%146 : memref<128xf32, #tpu.memory_space<any>>) dst(%148 : memref<128xf32, #tpu.memory_space<vmem>>)
    %c0_i32_77 = arith.constant 0 : i32
    %c0_i32_78 = arith.constant 0 : i32
    %c0_i32_79 = arith.constant 0 : i32
    %c0_i32_80 = arith.constant 0 : i32
    %151 = tpu.memref_slice %arg4[%c0_i32_77, %c0_i32_80] : memref<32x128xf32, #tpu.memory_space<any>> -> memref<1x128xf32, #tpu.memory_space<any>>
    %152 = tpu.memref_squeeze %151 : memref<1x128xf32, #tpu.memory_space<any>> -> memref<128xf32, #tpu.memory_space<any>>
    %c0_i32_81 = arith.constant 0 : i32
    %153 = tpu.memref_slice %arg7[%c0_i32_78, %c0_i32_81] : memref<8x128xf32, #tpu.memory_space<vmem>> -> memref<1x128xf32, #tpu.memory_space<vmem>>
    %154 = tpu.memref_squeeze %153 : memref<1x128xf32, #tpu.memory_space<vmem>> -> memref<128xf32, #tpu.memory_space<vmem>>
    %155 = tpu.memref_slice %arg9[%c0_i32_79] : memref<8x!tpu.dma_semaphore, #tpu.memory_space<semaphore_mem>> -> memref<1x!tpu.dma_semaphore, #tpu.memory_space<semaphore_mem>>
    %156 = tpu.memref_squeeze %155 : memref<1x!tpu.dma_semaphore, #tpu.memory_space<semaphore_mem>> -> memref<!tpu.dma_semaphore, #tpu.memory_space<semaphore_mem>>
    tpu.wait_dma2 semaphore(%156 : memref<!tpu.dma_semaphore, #tpu.memory_space<semaphore_mem>>) src(%152 : memref<128xf32, #tpu.memory_space<any>>) dst(%154 : memref<128xf32, #tpu.memory_space<vmem>>)
    %c0_i32_82 = arith.constant 0 : i32
    %c1_i32_83 = arith.constant 1 : i32
    %c1_i32_84 = arith.constant 1 : i32
    %c0_i32_85 = arith.constant 0 : i32
    %157 = tpu.memref_slice %arg3[%c0_i32_82, %c0_i32_85] : memref<512x128xf32, #tpu.memory_space<any>> -> memref<1x128xf32, #tpu.memory_space<any>>
    %158 = tpu.memref_squeeze %157 : memref<1x128xf32, #tpu.memory_space<any>> -> memref<128xf32, #tpu.memory_space<any>>
    %c0_i32_86 = arith.constant 0 : i32
    %159 = tpu.memref_slice %arg6[%c1_i32_83, %c0_i32_86] : memref<8x128xf32, #tpu.memory_space<vmem>> -> memref<1x128xf32, #tpu.memory_space<vmem>>
    %160 = tpu.memref_squeeze %159 : memref<1x128xf32, #tpu.memory_space<vmem>> -> memref<128xf32, #tpu.memory_space<vmem>>
    %161 = tpu.memref_slice %arg8[%c1_i32_84] : memref<8x!tpu.dma_semaphore, #tpu.memory_space<semaphore_mem>> -> memref<1x!tpu.dma_semaphore, #tpu.memory_space<semaphore_mem>>
    %162 = tpu.memref_squeeze %161 : memref<1x!tpu.dma_semaphore, #tpu.memory_space<semaphore_mem>> -> memref<!tpu.dma_semaphore, #tpu.memory_space<semaphore_mem>>
    tpu.wait_dma2 semaphore(%162 : memref<!tpu.dma_semaphore, #tpu.memory_space<semaphore_mem>>) src(%158 : memref<128xf32, #tpu.memory_space<any>>) dst(%160 : memref<128xf32, #tpu.memory_space<vmem>>)
    %c0_i32_87 = arith.constant 0 : i32
    %c1_i32_88 = arith.constant 1 : i32
    %c1_i32_89 = arith.constant 1 : i32
    %c0_i32_90 = arith.constant 0 : i32
    %163 = tpu.memref_slice %arg4[%c0_i32_87, %c0_i32_90] : memref<32x128xf32, #tpu.memory_space<any>> -> memref<1x128xf32, #tpu.memory_space<any>>
    %164 = tpu.memref_squeeze %163 : memref<1x128xf32, #tpu.memory_space<any>> -> memref<128xf32, #tpu.memory_space<any>>
    %c0_i32_91 = arith.constant 0 : i32
    %165 = tpu.memref_slice %arg7[%c1_i32_88, %c0_i32_91] : memref<8x128xf32, #tpu.memory_space<vmem>> -> memref<1x128xf32, #tpu.memory_space<vmem>>
    %166 = tpu.memref_squeeze %165 : memref<1x128xf32, #tpu.memory_space<vmem>> -> memref<128xf32, #tpu.memory_space<vmem>>
    %167 = tpu.memref_slice %arg9[%c1_i32_89] : memref<8x!tpu.dma_semaphore, #tpu.memory_space<semaphore_mem>> -> memref<1x!tpu.dma_semaphore, #tpu.memory_space<semaphore_mem>>
    %168 = tpu.memref_squeeze %167 : memref<1x!tpu.dma_semaphore, #tpu.memory_space<semaphore_mem>> -> memref<!tpu.dma_semaphore, #tpu.memory_space<semaphore_mem>>
    tpu.wait_dma2 semaphore(%168 : memref<!tpu.dma_semaphore, #tpu.memory_space<semaphore_mem>>) src(%164 : memref<128xf32, #tpu.memory_space<any>>) dst(%166 : memref<128xf32, #tpu.memory_space<vmem>>)
    %c0_i32_92 = arith.constant 0 : i32
    %c2_i32_93 = arith.constant 2 : i32
    %c2_i32_94 = arith.constant 2 : i32
    %c0_i32_95 = arith.constant 0 : i32
    %169 = tpu.memref_slice %arg3[%c0_i32_92, %c0_i32_95] : memref<512x128xf32, #tpu.memory_space<any>> -> memref<1x128xf32, #tpu.memory_space<any>>
    %170 = tpu.memref_squeeze %169 : memref<1x128xf32, #tpu.memory_space<any>> -> memref<128xf32, #tpu.memory_space<any>>
    %c0_i32_96 = arith.constant 0 : i32
    %171 = tpu.memref_slice %arg6[%c2_i32_93, %c0_i32_96] : memref<8x128xf32, #tpu.memory_space<vmem>> -> memref<1x128xf32, #tpu.memory_space<vmem>>
    %172 = tpu.memref_squeeze %171 : memref<1x128xf32, #tpu.memory_space<vmem>> -> memref<128xf32, #tpu.memory_space<vmem>>
    %173 = tpu.memref_slice %arg8[%c2_i32_94] : memref<8x!tpu.dma_semaphore, #tpu.memory_space<semaphore_mem>> -> memref<1x!tpu.dma_semaphore, #tpu.memory_space<semaphore_mem>>
    %174 = tpu.memref_squeeze %173 : memref<1x!tpu.dma_semaphore, #tpu.memory_space<semaphore_mem>> -> memref<!tpu.dma_semaphore, #tpu.memory_space<semaphore_mem>>
    tpu.wait_dma2 semaphore(%174 : memref<!tpu.dma_semaphore, #tpu.memory_space<semaphore_mem>>) src(%170 : memref<128xf32, #tpu.memory_space<any>>) dst(%172 : memref<128xf32, #tpu.memory_space<vmem>>)
    %c0_i32_97 = arith.constant 0 : i32
    %c2_i32_98 = arith.constant 2 : i32
    %c2_i32_99 = arith.constant 2 : i32
    %c0_i32_100 = arith.constant 0 : i32
    %175 = tpu.memref_slice %arg4[%c0_i32_97, %c0_i32_100] : memref<32x128xf32, #tpu.memory_space<any>> -> memref<1x128xf32, #tpu.memory_space<any>>
    %176 = tpu.memref_squeeze %175 : memref<1x128xf32, #tpu.memory_space<any>> -> memref<128xf32, #tpu.memory_space<any>>
    %c0_i32_101 = arith.constant 0 : i32
    %177 = tpu.memref_slice %arg7[%c2_i32_98, %c0_i32_101] : memref<8x128xf32, #tpu.memory_space<vmem>> -> memref<1x128xf32, #tpu.memory_space<vmem>>
    %178 = tpu.memref_squeeze %177 : memref<1x128xf32, #tpu.memory_space<vmem>> -> memref<128xf32, #tpu.memory_space<vmem>>
    %179 = tpu.memref_slice %arg9[%c2_i32_99] : memref<8x!tpu.dma_semaphore, #tpu.memory_space<semaphore_mem>> -> memref<1x!tpu.dma_semaphore, #tpu.memory_space<semaphore_mem>>
    %180 = tpu.memref_squeeze %179 : memref<1x!tpu.dma_semaphore, #tpu.memory_space<semaphore_mem>> -> memref<!tpu.dma_semaphore, #tpu.memory_space<semaphore_mem>>
    tpu.wait_dma2 semaphore(%180 : memref<!tpu.dma_semaphore, #tpu.memory_space<semaphore_mem>>) src(%176 : memref<128xf32, #tpu.memory_space<any>>) dst(%178 : memref<128xf32, #tpu.memory_space<vmem>>)
    %c0_i32_102 = arith.constant 0 : i32
    %c3_i32_103 = arith.constant 3 : i32
    %c3_i32_104 = arith.constant 3 : i32
    %c0_i32_105 = arith.constant 0 : i32
    %181 = tpu.memref_slice %arg3[%c0_i32_102, %c0_i32_105] : memref<512x128xf32, #tpu.memory_space<any>> -> memref<1x128xf32, #tpu.memory_space<any>>
    %182 = tpu.memref_squeeze %181 : memref<1x128xf32, #tpu.memory_space<any>> -> memref<128xf32, #tpu.memory_space<any>>
    %c0_i32_106 = arith.constant 0 : i32
    %183 = tpu.memref_slice %arg6[%c3_i32_103, %c0_i32_106] : memref<8x128xf32, #tpu.memory_space<vmem>> -> memref<1x128xf32, #tpu.memory_space<vmem>>
    %184 = tpu.memref_squeeze %183 : memref<1x128xf32, #tpu.memory_space<vmem>> -> memref<128xf32, #tpu.memory_space<vmem>>
    %185 = tpu.memref_slice %arg8[%c3_i32_104] : memref<8x!tpu.dma_semaphore, #tpu.memory_space<semaphore_mem>> -> memref<1x!tpu.dma_semaphore, #tpu.memory_space<semaphore_mem>>
    %186 = tpu.memref_squeeze %185 : memref<1x!tpu.dma_semaphore, #tpu.memory_space<semaphore_mem>> -> memref<!tpu.dma_semaphore, #tpu.memory_space<semaphore_mem>>
    tpu.wait_dma2 semaphore(%186 : memref<!tpu.dma_semaphore, #tpu.memory_space<semaphore_mem>>) src(%182 : memref<128xf32, #tpu.memory_space<any>>) dst(%184 : memref<128xf32, #tpu.memory_space<vmem>>)
    %c0_i32_107 = arith.constant 0 : i32
    %c3_i32_108 = arith.constant 3 : i32
    %c3_i32_109 = arith.constant 3 : i32
    %c0_i32_110 = arith.constant 0 : i32
    %187 = tpu.memref_slice %arg4[%c0_i32_107, %c0_i32_110] : memref<32x128xf32, #tpu.memory_space<any>> -> memref<1x128xf32, #tpu.memory_space<any>>
    %188 = tpu.memref_squeeze %187 : memref<1x128xf32, #tpu.memory_space<any>> -> memref<128xf32, #tpu.memory_space<any>>
    %c0_i32_111 = arith.constant 0 : i32
    %189 = tpu.memref_slice %arg7[%c3_i32_108, %c0_i32_111] : memref<8x128xf32, #tpu.memory_space<vmem>> -> memref<1x128xf32, #tpu.memory_space<vmem>>
    %190 = tpu.memref_squeeze %189 : memref<1x128xf32, #tpu.memory_space<vmem>> -> memref<128xf32, #tpu.memory_space<vmem>>
    %191 = tpu.memref_slice %arg9[%c3_i32_109] : memref<8x!tpu.dma_semaphore, #tpu.memory_space<semaphore_mem>> -> memref<1x!tpu.dma_semaphore, #tpu.memory_space<semaphore_mem>>
    %192 = tpu.memref_squeeze %191 : memref<1x!tpu.dma_semaphore, #tpu.memory_space<semaphore_mem>> -> memref<!tpu.dma_semaphore, #tpu.memory_space<semaphore_mem>>
    tpu.wait_dma2 semaphore(%192 : memref<!tpu.dma_semaphore, #tpu.memory_space<semaphore_mem>>) src(%188 : memref<128xf32, #tpu.memory_space<any>>) dst(%190 : memref<128xf32, #tpu.memory_space<vmem>>)
    %c0_i32_112 = arith.constant 0 : i32
    %c4_i32_113 = arith.constant 4 : i32
    %c4_i32_114 = arith.constant 4 : i32
    %c0_i32_115 = arith.constant 0 : i32
    %193 = tpu.memref_slice %arg3[%c0_i32_112, %c0_i32_115] : memref<512x128xf32, #tpu.memory_space<any>> -> memref<1x128xf32, #tpu.memory_space<any>>
    %194 = tpu.memref_squeeze %193 : memref<1x128xf32, #tpu.memory_space<any>> -> memref<128xf32, #tpu.memory_space<any>>
    %c0_i32_116 = arith.constant 0 : i32
    %195 = tpu.memref_slice %arg6[%c4_i32_113, %c0_i32_116] : memref<8x128xf32, #tpu.memory_space<vmem>> -> memref<1x128xf32, #tpu.memory_space<vmem>>
    %196 = tpu.memref_squeeze %195 : memref<1x128xf32, #tpu.memory_space<vmem>> -> memref<128xf32, #tpu.memory_space<vmem>>
    %197 = tpu.memref_slice %arg8[%c4_i32_114] : memref<8x!tpu.dma_semaphore, #tpu.memory_space<semaphore_mem>> -> memref<1x!tpu.dma_semaphore, #tpu.memory_space<semaphore_mem>>
    %198 = tpu.memref_squeeze %197 : memref<1x!tpu.dma_semaphore, #tpu.memory_space<semaphore_mem>> -> memref<!tpu.dma_semaphore, #tpu.memory_space<semaphore_mem>>
    tpu.wait_dma2 semaphore(%198 : memref<!tpu.dma_semaphore, #tpu.memory_space<semaphore_mem>>) src(%194 : memref<128xf32, #tpu.memory_space<any>>) dst(%196 : memref<128xf32, #tpu.memory_space<vmem>>)
    %c0_i32_117 = arith.constant 0 : i32
    %c4_i32_118 = arith.constant 4 : i32
    %c4_i32_119 = arith.constant 4 : i32
    %c0_i32_120 = arith.constant 0 : i32
    %199 = tpu.memref_slice %arg4[%c0_i32_117, %c0_i32_120] : memref<32x128xf32, #tpu.memory_space<any>> -> memref<1x128xf32, #tpu.memory_space<any>>
    %200 = tpu.memref_squeeze %199 : memref<1x128xf32, #tpu.memory_space<any>> -> memref<128xf32, #tpu.memory_space<any>>
    %c0_i32_121 = arith.constant 0 : i32
    %201 = tpu.memref_slice %arg7[%c4_i32_118, %c0_i32_121] : memref<8x128xf32, #tpu.memory_space<vmem>> -> memref<1x128xf32, #tpu.memory_space<vmem>>
    %202 = tpu.memref_squeeze %201 : memref<1x128xf32, #tpu.memory_space<vmem>> -> memref<128xf32, #tpu.memory_space<vmem>>
    %203 = tpu.memref_slice %arg9[%c4_i32_119] : memref<8x!tpu.dma_semaphore, #tpu.memory_space<semaphore_mem>> -> memref<1x!tpu.dma_semaphore, #tpu.memory_space<semaphore_mem>>
    %204 = tpu.memref_squeeze %203 : memref<1x!tpu.dma_semaphore, #tpu.memory_space<semaphore_mem>> -> memref<!tpu.dma_semaphore, #tpu.memory_space<semaphore_mem>>
    tpu.wait_dma2 semaphore(%204 : memref<!tpu.dma_semaphore, #tpu.memory_space<semaphore_mem>>) src(%200 : memref<128xf32, #tpu.memory_space<any>>) dst(%202 : memref<128xf32, #tpu.memory_space<vmem>>)
    %c0_i32_122 = arith.constant 0 : i32
    %c5_i32_123 = arith.constant 5 : i32
    %c5_i32_124 = arith.constant 5 : i32
    %c0_i32_125 = arith.constant 0 : i32
    %205 = tpu.memref_slice %arg3[%c0_i32_122, %c0_i32_125] : memref<512x128xf32, #tpu.memory_space<any>> -> memref<1x128xf32, #tpu.memory_space<any>>
    %206 = tpu.memref_squeeze %205 : memref<1x128xf32, #tpu.memory_space<any>> -> memref<128xf32, #tpu.memory_space<any>>
    %c0_i32_126 = arith.constant 0 : i32
    %207 = tpu.memref_slice %arg6[%c5_i32_123, %c0_i32_126] : memref<8x128xf32, #tpu.memory_space<vmem>> -> memref<1x128xf32, #tpu.memory_space<vmem>>
    %208 = tpu.memref_squeeze %207 : memref<1x128xf32, #tpu.memory_space<vmem>> -> memref<128xf32, #tpu.memory_space<vmem>>
    %209 = tpu.memref_slice %arg8[%c5_i32_124] : memref<8x!tpu.dma_semaphore, #tpu.memory_space<semaphore_mem>> -> memref<1x!tpu.dma_semaphore, #tpu.memory_space<semaphore_mem>>
    %210 = tpu.memref_squeeze %209 : memref<1x!tpu.dma_semaphore, #tpu.memory_space<semaphore_mem>> -> memref<!tpu.dma_semaphore, #tpu.memory_space<semaphore_mem>>
    tpu.wait_dma2 semaphore(%210 : memref<!tpu.dma_semaphore, #tpu.memory_space<semaphore_mem>>) src(%206 : memref<128xf32, #tpu.memory_space<any>>) dst(%208 : memref<128xf32, #tpu.memory_space<vmem>>)
    %c0_i32_127 = arith.constant 0 : i32
    %c5_i32_128 = arith.constant 5 : i32
    %c5_i32_129 = arith.constant 5 : i32
    %c0_i32_130 = arith.constant 0 : i32
    %211 = tpu.memref_slice %arg4[%c0_i32_127, %c0_i32_130] : memref<32x128xf32, #tpu.memory_space<any>> -> memref<1x128xf32, #tpu.memory_space<any>>
    %212 = tpu.memref_squeeze %211 : memref<1x128xf32, #tpu.memory_space<any>> -> memref<128xf32, #tpu.memory_space<any>>
    %c0_i32_131 = arith.constant 0 : i32
    %213 = tpu.memref_slice %arg7[%c5_i32_128, %c0_i32_131] : memref<8x128xf32, #tpu.memory_space<vmem>> -> memref<1x128xf32, #tpu.memory_space<vmem>>
    %214 = tpu.memref_squeeze %213 : memref<1x128xf32, #tpu.memory_space<vmem>> -> memref<128xf32, #tpu.memory_space<vmem>>
    %215 = tpu.memref_slice %arg9[%c5_i32_129] : memref<8x!tpu.dma_semaphore, #tpu.memory_space<semaphore_mem>> -> memref<1x!tpu.dma_semaphore, #tpu.memory_space<semaphore_mem>>
    %216 = tpu.memref_squeeze %215 : memref<1x!tpu.dma_semaphore, #tpu.memory_space<semaphore_mem>> -> memref<!tpu.dma_semaphore, #tpu.memory_space<semaphore_mem>>
    tpu.wait_dma2 semaphore(%216 : memref<!tpu.dma_semaphore, #tpu.memory_space<semaphore_mem>>) src(%212 : memref<128xf32, #tpu.memory_space<any>>) dst(%214 : memref<128xf32, #tpu.memory_space<vmem>>)
    %c0_i32_132 = arith.constant 0 : i32
    %c6_i32_133 = arith.constant 6 : i32
    %c6_i32_134 = arith.constant 6 : i32
    %c0_i32_135 = arith.constant 0 : i32
    %217 = tpu.memref_slice %arg3[%c0_i32_132, %c0_i32_135] : memref<512x128xf32, #tpu.memory_space<any>> -> memref<1x128xf32, #tpu.memory_space<any>>
    %218 = tpu.memref_squeeze %217 : memref<1x128xf32, #tpu.memory_space<any>> -> memref<128xf32, #tpu.memory_space<any>>
    %c0_i32_136 = arith.constant 0 : i32
    %219 = tpu.memref_slice %arg6[%c6_i32_133, %c0_i32_136] : memref<8x128xf32, #tpu.memory_space<vmem>> -> memref<1x128xf32, #tpu.memory_space<vmem>>
    %220 = tpu.memref_squeeze %219 : memref<1x128xf32, #tpu.memory_space<vmem>> -> memref<128xf32, #tpu.memory_space<vmem>>
    %221 = tpu.memref_slice %arg8[%c6_i32_134] : memref<8x!tpu.dma_semaphore, #tpu.memory_space<semaphore_mem>> -> memref<1x!tpu.dma_semaphore, #tpu.memory_space<semaphore_mem>>
    %222 = tpu.memref_squeeze %221 : memref<1x!tpu.dma_semaphore, #tpu.memory_space<semaphore_mem>> -> memref<!tpu.dma_semaphore, #tpu.memory_space<semaphore_mem>>
    tpu.wait_dma2 semaphore(%222 : memref<!tpu.dma_semaphore, #tpu.memory_space<semaphore_mem>>) src(%218 : memref<128xf32, #tpu.memory_space<any>>) dst(%220 : memref<128xf32, #tpu.memory_space<vmem>>)
    %c0_i32_137 = arith.constant 0 : i32
    %c6_i32_138 = arith.constant 6 : i32
    %c6_i32_139 = arith.constant 6 : i32
    %c0_i32_140 = arith.constant 0 : i32
    %223 = tpu.memref_slice %arg4[%c0_i32_137, %c0_i32_140] : memref<32x128xf32, #tpu.memory_space<any>> -> memref<1x128xf32, #tpu.memory_space<any>>
    %224 = tpu.memref_squeeze %223 : memref<1x128xf32, #tpu.memory_space<any>> -> memref<128xf32, #tpu.memory_space<any>>
    %c0_i32_141 = arith.constant 0 : i32
    %225 = tpu.memref_slice %arg7[%c6_i32_138, %c0_i32_141] : memref<8x128xf32, #tpu.memory_space<vmem>> -> memref<1x128xf32, #tpu.memory_space<vmem>>
    %226 = tpu.memref_squeeze %225 : memref<1x128xf32, #tpu.memory_space<vmem>> -> memref<128xf32, #tpu.memory_space<vmem>>
    %227 = tpu.memref_slice %arg9[%c6_i32_139] : memref<8x!tpu.dma_semaphore, #tpu.memory_space<semaphore_mem>> -> memref<1x!tpu.dma_semaphore, #tpu.memory_space<semaphore_mem>>
    %228 = tpu.memref_squeeze %227 : memref<1x!tpu.dma_semaphore, #tpu.memory_space<semaphore_mem>> -> memref<!tpu.dma_semaphore, #tpu.memory_space<semaphore_mem>>
    tpu.wait_dma2 semaphore(%228 : memref<!tpu.dma_semaphore, #tpu.memory_space<semaphore_mem>>) src(%224 : memref<128xf32, #tpu.memory_space<any>>) dst(%226 : memref<128xf32, #tpu.memory_space<vmem>>)
    %c0_i32_142 = arith.constant 0 : i32
    %c7_i32_143 = arith.constant 7 : i32
    %c7_i32_144 = arith.constant 7 : i32
    %c0_i32_145 = arith.constant 0 : i32
    %229 = tpu.memref_slice %arg3[%c0_i32_142, %c0_i32_145] : memref<512x128xf32, #tpu.memory_space<any>> -> memref<1x128xf32, #tpu.memory_space<any>>
    %230 = tpu.memref_squeeze %229 : memref<1x128xf32, #tpu.memory_space<any>> -> memref<128xf32, #tpu.memory_space<any>>
    %c0_i32_146 = arith.constant 0 : i32
    %231 = tpu.memref_slice %arg6[%c7_i32_143, %c0_i32_146] : memref<8x128xf32, #tpu.memory_space<vmem>> -> memref<1x128xf32, #tpu.memory_space<vmem>>
    %232 = tpu.memref_squeeze %231 : memref<1x128xf32, #tpu.memory_space<vmem>> -> memref<128xf32, #tpu.memory_space<vmem>>
    %233 = tpu.memref_slice %arg8[%c7_i32_144] : memref<8x!tpu.dma_semaphore, #tpu.memory_space<semaphore_mem>> -> memref<1x!tpu.dma_semaphore, #tpu.memory_space<semaphore_mem>>
    %234 = tpu.memref_squeeze %233 : memref<1x!tpu.dma_semaphore, #tpu.memory_space<semaphore_mem>> -> memref<!tpu.dma_semaphore, #tpu.memory_space<semaphore_mem>>
    tpu.wait_dma2 semaphore(%234 : memref<!tpu.dma_semaphore, #tpu.memory_space<semaphore_mem>>) src(%230 : memref<128xf32, #tpu.memory_space<any>>) dst(%232 : memref<128xf32, #tpu.memory_space<vmem>>)
    %c0_i32_147 = arith.constant 0 : i32
    %c7_i32_148 = arith.constant 7 : i32
    %c7_i32_149 = arith.constant 7 : i32
    %c0_i32_150 = arith.constant 0 : i32
    %235 = tpu.memref_slice %arg4[%c0_i32_147, %c0_i32_150] : memref<32x128xf32, #tpu.memory_space<any>> -> memref<1x128xf32, #tpu.memory_space<any>>
    %236 = tpu.memref_squeeze %235 : memref<1x128xf32, #tpu.memory_space<any>> -> memref<128xf32, #tpu.memory_space<any>>
    %c0_i32_151 = arith.constant 0 : i32
    %237 = tpu.memref_slice %arg7[%c7_i32_148, %c0_i32_151] : memref<8x128xf32, #tpu.memory_space<vmem>> -> memref<1x128xf32, #tpu.memory_space<vmem>>
    %238 = tpu.memref_squeeze %237 : memref<1x128xf32, #tpu.memory_space<vmem>> -> memref<128xf32, #tpu.memory_space<vmem>>
    %239 = tpu.memref_slice %arg9[%c7_i32_149] : memref<8x!tpu.dma_semaphore, #tpu.memory_space<semaphore_mem>> -> memref<1x!tpu.dma_semaphore, #tpu.memory_space<semaphore_mem>>
    %240 = tpu.memref_squeeze %239 : memref<1x!tpu.dma_semaphore, #tpu.memory_space<semaphore_mem>> -> memref<!tpu.dma_semaphore, #tpu.memory_space<semaphore_mem>>
    tpu.wait_dma2 semaphore(%240 : memref<!tpu.dma_semaphore, #tpu.memory_space<semaphore_mem>>) src(%236 : memref<128xf32, #tpu.memory_space<any>>) dst(%238 : memref<128xf32, #tpu.memory_space<vmem>>)
    %c0 = arith.constant 0 : index
    %c0_152 = arith.constant 0 : index
    %241 = vector.load %arg6[%c0, %c0_152] : memref<8x128xf32, #tpu.memory_space<vmem>>, vector<8x128xf32>
    %c0_153 = arith.constant 0 : index
    %c0_154 = arith.constant 0 : index
    %242 = vector.load %arg7[%c0_153, %c0_154] : memref<8x128xf32, #tpu.memory_space<vmem>>, vector<8x128xf32>
    %243 = arith.addf %241, %242 : vector<8x128xf32>
    %c0_155 = arith.constant 0 : index
    %c0_156 = arith.constant 0 : index
    %244 = vector.load %arg5[%c0_155, %c0_156] : memref<8x128xf32, #tpu.memory_space<vmem>>, vector<8x128xf32>
    tpu.vector_store %arg5[%c0_155, %c0_156], %243 {strides = array<i32>} : memref<8x128xf32, #tpu.memory_space<vmem>>, vector<8x128xf32>,
    return
  }
  func.func @transform_2(%arg0: i32, %arg1: memref<16xi32, #tpu.memory_space<smem>>, %arg2: memref<16xi32, #tpu.memory_space<smem>>) -> (i32, i32) {
    %c0_i32 = arith.constant 0 : i32
    %c0_i32_0 = arith.constant 0 : i32
    return %arg0, %c0_i32 : i32, i32
  }
}

</mosaic_0001>

<llo_original>
// kernel: tpu_custom_call.1
$region0: #{tpu_custom_call.1}
  #allocation0 [shape = 'u32[]', space=smem, size = 0x4, offset = 0x4, fixed_abs, tag = 'smem constant byte address 0x4 - core index']
  #allocation1 [shape = 'u32[72,128]{1,0:T(1,128)}', space=vmem, size = 0x9000, scoped, tag = 'internal scratch']
  #allocation2 [shape = 'f32[8,128]{1,0:T(8,128)}', space=vmem, size = 0x1000, scoped, tag = 'scratch operand']
  #allocation3 [shape = 'f32[8,128]{1,0:T(8,128)}', space=vmem, size = 0x1000, scoped, tag = 'scratch operand']
  #allocation4 [shape = 's32[8]{0}', space=sflag, size = 0x20, scoped, tag = 'scratch operand']
  #allocation5 [shape = 's32[8]{0}', space=sflag, size = 0x20, scoped, tag = 'scratch operand']
  #allocation6 [shape = 's32[1]{0}', space=sflag, size = 0x4, scoped, tag = 'scoped memory for tpu_custom_call.1']
  #allocation7 [shape = 'u8[512]{0}', space=smem, size = 0x200, scoped, tag = 'prefetched SMEM operand 0']
  #allocation8 [shape = 'u8[512]{0}', space=smem, size = 0x200, scoped, tag = 'prefetched SMEM operand 1']
  #allocation11 [shape = 's32[]', space=sflag, size = 0x4, offset = 0, fixed_abs, tag = 'sflag constant byte address 0x0 - dummy sync flag']
  #allocation12 [shape = 's32[]', space=sflag, size = 0x4, offset = 0, fixed_abs, tag = 'sflag constant byte address 0x0 - dummy sync flag']
  #allocation13 [shape = 'u32[]', space=smem, size = 0x4, offset = 0x44, fixed_abs, tag = 'smem constant byte address 0x44 - assertion arg 0']
  #allocation14 [shape = 'u32[]', space=smem, size = 0x4, offset = 0x48, fixed_abs, tag = 'smem constant byte address 0x48 - assertion arg 1']
  #allocation15 [shape = 's32[]', space=sflag, size = 0x4, offset = 0, fixed_abs, tag = 'sflag constant byte address 0x0 - dummy sync flag']
  #allocation16 [shape = 's32[]', space=sflag, size = 0x4, offset = 0, fixed_abs, tag = 'sflag constant byte address 0x0 - dummy sync flag']
  #allocation17 [shape = 's32[]', space=sflag, size = 0x4, offset = 0, fixed_abs, tag = 'sflag constant byte address 0x0 - dummy sync flag']
  #allocation18 [shape = 's32[]', space=sflag, size = 0x4, offset = 0, fixed_abs, tag = 'sflag constant byte address 0x0 - dummy sync flag']
  #allocation19 [shape = 's32[]', space=sflag, size = 0x4, offset = 0, fixed_abs, tag = 'sflag constant byte address 0x0 - dummy sync flag']
  #allocation20 [shape = 's32[]', space=sflag, size = 0x4, offset = 0, fixed_abs, tag = 'sflag constant byte address 0x0 - dummy sync flag']
  #allocation21 [shape = 's32[]', space=sflag, size = 0x4, offset = 0, fixed_abs, tag = 'sflag constant byte address 0x0 - dummy sync flag']
  #allocation22 [shape = 's32[]', space=sflag, size = 0x4, offset = 0, fixed_abs, tag = 'sflag constant byte address 0x0 - dummy sync flag']
  #allocation23 [shape = 's32[]', space=sflag, size = 0x4, offset = 0, fixed_abs, tag = 'sflag constant byte address 0x0 - dummy sync flag']
  #allocation24 [shape = 's32[]', space=sflag, size = 0x4, offset = 0, fixed_abs, tag = 'sflag constant byte address 0x0 - dummy sync flag']
  #allocation25 [shape = 's32[]', space=sflag, size = 0x4, offset = 0, fixed_abs, tag = 'sflag constant byte address 0x0 - dummy sync flag']
  #allocation26 [shape = 's32[]', space=sflag, size = 0x4, offset = 0, fixed_abs, tag = 'sflag constant byte address 0x0 - dummy sync flag']
  #allocation27 [shape = 's32[]', space=sflag, size = 0x4, offset = 0, fixed_abs, tag = 'sflag constant byte address 0x0 - dummy sync flag']
  #allocation28 [shape = 's32[]', space=sflag, size = 0x4, offset = 0, fixed_abs, tag = 'sflag constant byte address 0x0 - dummy sync flag']
  #allocation29 [shape = 's32[]', space=sflag, size = 0x4, offset = 0, fixed_abs, tag = 'sflag constant byte address 0x0 - dummy sync flag']
  #allocation30 [shape = 's32[]', space=sflag, size = 0x4, offset = 0, fixed_abs, tag = 'sflag constant byte address 0x0 - dummy sync flag']
  #allocation31 [shape = 's32[]', space=sflag, size = 0x4, offset = 0, fixed_abs, tag = 'sflag constant byte address 0x0 - dummy sync flag']
  #allocation32 [shape = 's32[]', space=sflag, size = 0x4, offset = 0, fixed_abs, tag = 'sflag constant byte address 0x0 - dummy sync flag']
  #allocation33 [shape = 's32[]', space=sflag, size = 0x4, offset = 0, fixed_abs, tag = 'sflag constant byte address 0x0 - dummy sync flag']
  #allocation34 [shape = 's32[]', space=sflag, size = 0x4, offset = 0, fixed_abs, tag = 'sflag constant byte address 0x0 - dummy sync flag']
  #allocation35 [shape = 's32[]', space=sflag, size = 0x4, offset = 0, fixed_abs, tag = 'sflag constant byte address 0x0 - dummy sync flag']
  #allocation36 [shape = 's32[]', space=sflag, size = 0x4, offset = 0, fixed_abs, tag = 'sflag constant byte address 0x0 - dummy sync flag']
  #allocation37 [shape = 's32[]', space=sflag, size = 0x4, offset = 0, fixed_abs, tag = 'sflag constant byte address 0x0 - dummy sync flag']
  #allocation38 [shape = 's32[]', space=sflag, size = 0x4, offset = 0, fixed_abs, tag = 'sflag constant byte address 0x0 - dummy sync flag']
  #allocation39 [shape = 's32[]', space=sflag, size = 0x4, offset = 0, fixed_abs, tag = 'sflag constant byte address 0x0 - dummy sync flag']
  #allocation40 [shape = 's32[]', space=sflag, size = 0x4, offset = 0, fixed_abs, tag = 'sflag constant byte address 0x0 - dummy sync flag']
  #allocation41 [shape = 's32[]', space=sflag, size = 0x4, offset = 0, fixed_abs, tag = 'sflag constant byte address 0x0 - dummy sync flag']
  #allocation42 [shape = 's32[]', space=sflag, size = 0x4, offset = 0, fixed_abs, tag = 'sflag constant byte address 0x0 - dummy sync flag']
  #allocation43 [shape = 's32[]', space=sflag, size = 0x4, offset = 0, fixed_abs, tag = 'sflag constant byte address 0x0 - dummy sync flag']
  #allocation44 [shape = 's32[]', space=sflag, size = 0x4, offset = 0, fixed_abs, tag = 'sflag constant byte address 0x0 - dummy sync flag']
  %s0 = inlined_call_operand.hbm [shape: s32[16], index: 0, kind: input, shape index: {}]
  %s1 = inlined_call_operand.hbm [shape: s32[16], index: 1, kind: input, shape index: {}]
  %s2 = inlined_call_operand.hbm [shape: f32[512,128], index: 2, kind: input, shape index: {}]
  %s3 = inlined_call_operand.hbm [shape: f32[32,128], index: 3, kind: input, shape index: {}]
  %s4 = inlined_call_operand.hbm [shape: f32[16,128], index: 4, kind: output, shape index: {}]
  %s5 = sld [smem:[#allocation0]]
  $region89: #{tpu_custom_call.1} parent=0
    _
  %s7 = ssub.s32 1, %s5
  %s8 = scalar_select 0, %s7, %s5
  %s10 = sshll.u32 %s0, 4
  %s11 = int_to_ptr.hbm [resolvable:$true] %s10
  %13 = dma.hbm_to_smem %s11, 16, [#allocation7], [#allocation6]
  %s15 = sshll.u32 %s1, 4
  %s16 = int_to_ptr.hbm [resolvable:$true] %s15
  %18 = dma.hbm_to_smem %s16, 16, [#allocation8], [#allocation6]
  %20 = dma.done [#allocation6], 32
  %21 = sfence
  $region1: #{tpu_custom_call.1} parent=0
    #allocation9 [shape = 'u8[8192]{0}', space=vmem, size = 0x2000, scoped, tag = 'output window, operand 0']
    #allocation10 [shape = 's32[2]{0}', space=sflag, size = 0x8, scoped, tag = 'scoped memory for tpu_custom_call.1']
    %22 = vsyncpa [#allocation10], 0
    %s23 = scalar_lea.sflag [#allocation10], 1
    %24 = vsyncpa %s23, 0
    loop: start=0, step=1, limit=3
    $region2: #{tpu_custom_call.1} parent=1 // loop_pre_header
      _
    $region3: #{tpu_custom_call.1} parent=1 // loop_header
      %s26 = sphi 0, %s30
      %p27 = scmp.ge.s32.totalorder %s26, 3
      %s35 = sphi 0, %s37
      %s38 = sphi 0, %s35
      %s48 = sphi 0, %s38
    $region4: #{tpu_custom_call.1} parent=1 // loop_header_branch
      %29 = sbr.rel (%p27) target = $region8
    $region5: #{tpu_custom_call.1} parent=1 // loop_body
      %s31 = ssub.s32 %s26, 1
      %s32 = sadd.s32 %s26, 1
      %s33 = ssub.s32 %s26, %s32
      %p34 = scmp.eq.s32.totalorder %s33, 0
      %s36 = sadd.s32 %s35, 1
      %s37 = scalar_select %p34, %s35, %s36
      %p39 = pneg %p34
      %p40 = scmp.eq.s32.totalorder %s26, 1
      %p41 = por %p39, %p40
      %p42 = scmp.ne.s32.totalorder %s35, %s38
      %p43 = scmp.eq.s32.totalorder %s26, 0
      %p44 = por %p42, %p43
      %p45 = scmp.ne.s32.totalorder %s35, %s38
      %p46 = scmp.eq.s32.totalorder %s31, 1
      %p47 = por %p45, %p46
      %p49 = scmp.ne.s32.totalorder %s38, %s48
      %p50 = scmp.eq.s32.totalorder %s31, 0
      %p51 = por %p49, %p50
      %p52 = scmp.lt.s32.totalorder %s26, 2
      // Predicated region
      $region9: #{tpu_custom_call.1} parent=5 // pred_check
        %p53 = pneg %p52
      $region10: #{tpu_custom_call.1} parent=5 // pred_check_branch
        %55 = sbr.rel (%p53) target = $region12
      $region11: #{tpu_custom_call.1} parent=5 // pred_region
        %p56 = pneg %p44
        %p57 = pneg %p41
        %s58 = sand.u32 %s35, 1
        %s59 = scalar_lea.sflag [#allocation10], %s58
        %s60 = sand.u32 %s35, 1
        %s61 = smul.addr %s60, 8
        %s62 = scalar_lea.vmem [#allocation9], %s61
        %s63 = smul.u32 %s26, 8
        %s64 = sld [smem:[#allocation7 + %s63]]
        %s65 = sld [smem:[#allocation8 + %s63]]
        %s66 = scalar_lea.hbm %s2, %s64
        // Predicated region
        $region13: #{tpu_custom_call.1} parent=11 // pred_check
          _
        $region14: #{tpu_custom_call.1} parent=11 // pred_check_branch
          %68 = sbr.rel target = $region16
        $region15: #{tpu_custom_call.1} parent=11 // pred_region
          %69 = sst [smem:[#allocation13]] [#allocation12]
          %70 = sst [smem:[#allocation14]] [#allocation11]
        $region16: #{tpu_custom_call.1} parent=11 // pred_fallthru
          _
        %72 = shalt.err (0)
        %s74 = sshll.u32 %s66, 4
        %s75 = int_to_ptr.hbm [resolvable:$true] %s74
        %s76 = sshll.u32 [#allocation2], 4
        %s77 = int_to_ptr.vmem [resolvable:$true] %s76
        %79 = dma.hbm_to_vmem [thread:$0]  %s75, 16, %s77, [#allocation4]
        %s80 = scalar_lea.hbm %s3, %s65
        // Predicated region
        $region17: #{tpu_custom_call.1} parent=11 // pred_check
          _
        $region18: #{tpu_custom_call.1} parent=11 // pred_check_branch
          %82 = sbr.rel target = $region20
        $region19: #{tpu_custom_call.1} parent=11 // pred_region
          %83 = sst [smem:[#allocation13]] [#allocation16]
          %84 = sst [smem:[#allocation14]] [#allocation15]
        $region20: #{tpu_custom_call.1} parent=11 // pred_fallthru
          _
        %86 = shalt.err (0)
        %s88 = sshll.u32 %s80, 4
        %s89 = int_to_ptr.hbm [resolvable:$true] %s88
        %s90 = sshll.u32 [#allocation3], 4
        %s91 = int_to_ptr.vmem [resolvable:$true] %s90
        %93 = dma.hbm_to_vmem [thread:$0]  %s89, 16, %s91, [#allocation5]
        %s94 = sadd.s32 %s63, 1
        %s95 = sld [smem:[#allocation7 + %s94]]
        %s96 = sld [smem:[#allocation8 + %s94]]
        %s97 = scalar_lea.hbm %s2, %s95
        %s98 = scalar_lea.vmem [#allocation2], 1
        %s99 = scalar_lea.sflag [#allocation4], 1
        // Predicated region
        $region21: #{tpu_custom_call.1} parent=11 // pred_check
          _
        $region22: #{tpu_custom_call.1} parent=11 // pred_check_branch
          %101 = sbr.rel target = $region24
        $region23: #{tpu_custom_call.1} parent=11 // pred_region
          %102 = sst [smem:[#allocation13]] [#allocation18]
          %103 = sst [smem:[#allocation14]] [#allocation17]
        $region24: #{tpu_custom_call.1} parent=11 // pred_fallthru
          _
        %105 = shalt.err (0)
        %s107 = sshll.u32 %s97, 4
        %s108 = int_to_ptr.hbm [resolvable:$true] %s107
        %s109 = sshll.u32 %s98, 4
        %s110 = int_to_ptr.vmem [resolvable:$true] %s109
        %112 = dma.hbm_to_vmem [thread:$0]  %s108, 16, %s110, %s99
        %s113 = scalar_lea.hbm %s3, %s96
        %s114 = scalar_lea.vmem [#allocation3], 1
        %s115 = scalar_lea.sflag [#allocation5], 1
        // Predicated region
        $region25: #{tpu_custom_call.1} parent=11 // pred_check
          _
        $region26: #{tpu_custom_call.1} parent=11 // pred_check_branch
          %117 = sbr.rel target = $region28
        $region27: #{tpu_custom_call.1} parent=11 // pred_region
          %118 = sst [smem:[#allocation13]] [#allocation20]
          %119 = sst [smem:[#allocation14]] [#allocation19]
        $region28: #{tpu_custom_call.1} parent=11 // pred_fallthru
          _
        %121 = shalt.err (0)
        %s123 = sshll.u32 %s113, 4
        %s124 = int_to_ptr.hbm [resolvable:$true] %s123
        %s125 = sshll.u32 %s114, 4
        %s126 = int_to_ptr.vmem [resolvable:$true] %s125
        %128 = dma.hbm_to_vmem [thread:$0]  %s124, 16, %s126, %s115
        %s129 = sadd.s32 %s63, 2
        %s130 = sld [smem:[#allocation7 + %s129]]
        %s131 = sld [smem:[#allocation8 + %s129]]
        %s132 = scalar_lea.hbm %s2, %s130
        %s133 = scalar_lea.vmem [#allocation2], 2
        %s134 = scalar_lea.sflag [#allocation4], 2
        // Predicated region
        $region29: #{tpu_custom_call.1} parent=11 // pred_check
          _
        $region30: #{tpu_custom_call.1} parent=11 // pred_check_branch
          %136 = sbr.rel target = $region32
        $region31: #{tpu_custom_call.1} parent=11 // pred_region
          %137 = sst [smem:[#allocation13]] [#allocation22]
          %138 = sst [smem:[#allocation14]] [#allocation21]
        $region32: #{tpu_custom_call.1} parent=11 // pred_fallthru
          _
        %140 = shalt.err (0)
        %s142 = sshll.u32 %s132, 4
        %s143 = int_to_ptr.hbm [resolvable:$true] %s142
        %s144 = sshll.u32 %s133, 4
        %s145 = int_to_ptr.vmem [resolvable:$true] %s144
        %147 = dma.hbm_to_vmem [thread:$0]  %s143, 16, %s145, %s134
        %s148 = scalar_lea.hbm %s3, %s131
        %s149 = scalar_lea.vmem [#allocation3], 2
        %s150 = scalar_lea.sflag [#allocation5], 2
        // Predicated region
        $region33: #{tpu_custom_call.1} parent=11 // pred_check
          _
        $region34: #{tpu_custom_call.1} parent=11 // pred_check_branch
          %152 = sbr.rel target = $region36
        $region35: #{tpu_custom_call.1} parent=11 // pred_region
          %153 = sst [smem:[#allocation13]] [#allocation24]
          %154 = sst [smem:[#allocation14]] [#allocation23]
        $region36: #{tpu_custom_call.1} parent=11 // pred_fallthru
          _
        %156 = shalt.err (0)
        %s158 = sshll.u32 %s148, 4
        %s159 = int_to_ptr.hbm [resolvable:$true] %s158
        %s160 = sshll.u32 %s149, 4
        %s161 = int_to_ptr.vmem [resolvable:$true] %s160
        %163 = dma.hbm_to_vmem [thread:$0]  %s159, 16, %s161, %s150
        %s164 = sadd.s32 %s63, 3
        %s165 = sld [smem:[#allocation7 + %s164]]
        %s166 = sld [smem:[#allocation8 + %s164]]
        %s167 = scalar_lea.hbm %s2, %s165
        %s168 = scalar_lea.vmem [#allocation2], 3
        %s169 = scalar_lea.sflag [#allocation4], 3
        // Predicated region
        $region37: #{tpu_custom_call.1} parent=11 // pred_check
          _
        $region38: #{tpu_custom_call.1} parent=11 // pred_check_branch
          %171 = sbr.rel target = $region40
        $region39: #{tpu_custom_call.1} parent=11 // pred_region
          %172 = sst [smem:[#allocation13]] [#allocation26]
          %173 = sst [smem:[#allocation14]] [#allocation25]
        $region40: #{tpu_custom_call.1} parent=11 // pred_fallthru
          _
        %175 = shalt.err (0)
        %s177 = sshll.u32 %s167, 4
        %s178 = int_to_ptr.hbm [resolvable:$true] %s177
        %s179 = sshll.u32 %s168, 4
        %s180 = int_to_ptr.vmem [resolvable:$true] %s179
        %182 = dma.hbm_to_vmem [thread:$0]  %s178, 16, %s180, %s169
        %s183 = scalar_lea.hbm %s3, %s166
        %s184 = scalar_lea.vmem [#allocation3], 3
        %s185 = scalar_lea.sflag [#allocation5], 3
        // Predicated region
        $region41: #{tpu_custom_call.1} parent=11 // pred_check
          _
        $region42: #{tpu_custom_call.1} parent=11 // pred_check_branch
          %187 = sbr.rel target = $region44
        $region43: #{tpu_custom_call.1} parent=11 // pred_region
          %188 = sst [smem:[#allocation13]] [#allocation28]
          %189 = sst [smem:[#allocation14]] [#allocation27]
        $region44: #{tpu_custom_call.1} parent=11 // pred_fallthru
          _
        %191 = shalt.err (0)
        %s193 = sshll.u32 %s183, 4
        %s194 = int_to_ptr.hbm [resolvable:$true] %s193
        %s195 = sshll.u32 %s184, 4
        %s196 = int_to_ptr.vmem [resolvable:$true] %s195
        %198 = dma.hbm_to_vmem [thread:$0]  %s194, 16, %s196, %s185
        %s199 = sadd.s32 %s63, 4
        %s200 = sld [smem:[#allocation7 + %s199]]
        %s201 = sld [smem:[#allocation8 + %s199]]
        %s202 = scalar_lea.hbm %s2, %s200
        %s203 = scalar_lea.vmem [#allocation2], 4
        %s204 = scalar_lea.sflag [#allocation4], 4
        // Predicated region
        $region45: #{tpu_custom_call.1} parent=11 // pred_check
          _
        $region46: #{tpu_custom_call.1} parent=11 // pred_check_branch
          %206 = sbr.rel target = $region48
        $region47: #{tpu_custom_call.1} parent=11 // pred_region
          %207 = sst [smem:[#allocation13]] [#allocation30]
          %208 = sst [smem:[#allocation14]] [#allocation29]
        $region48: #{tpu_custom_call.1} parent=11 // pred_fallthru
          _
        %210 = shalt.err (0)
        %s212 = sshll.u32 %s202, 4
        %s213 = int_to_ptr.hbm [resolvable:$true] %s212
        %s214 = sshll.u32 %s203, 4
        %s215 = int_to_ptr.vmem [resolvable:$true] %s214
        %217 = dma.hbm_to_vmem [thread:$0]  %s213, 16, %s215, %s204
        %s218 = scalar_lea.hbm %s3, %s201
        %s219 = scalar_lea.vmem [#allocation3], 4
        %s220 = scalar_lea.sflag [#allocation5], 4
        // Predicated region
        $region49: #{tpu_custom_call.1} parent=11 // pred_check
          _
        $region50: #{tpu_custom_call.1} parent=11 // pred_check_branch
          %222 = sbr.rel target = $region52
        $region51: #{tpu_custom_call.1} parent=11 // pred_region
          %223 = sst [smem:[#allocation13]] [#allocation32]
          %224 = sst [smem:[#allocation14]] [#allocation31]
        $region52: #{tpu_custom_call.1} parent=11 // pred_fallthru
          _
        %226 = shalt.err (0)
        %s228 = sshll.u32 %s218, 4
        %s229 = int_to_ptr.hbm [resolvable:$true] %s228
        %s230 = sshll.u32 %s219, 4
        %s231 = int_to_ptr.vmem [resolvable:$true] %s230
        %233 = dma.hbm_to_vmem [thread:$0]  %s229, 16, %s231, %s220
        %s234 = sadd.s32 %s63, 5
        %s235 = sld [smem:[#allocation7 + %s234]]
        %s236 = sld [smem:[#allocation8 + %s234]]
        %s237 = scalar_lea.hbm %s2, %s235
        %s238 = scalar_lea.vmem [#allocation2], 5
        %s239 = scalar_lea.sflag [#allocation4], 5
        // Predicated region
        $region53: #{tpu_custom_call.1} parent=11 // pred_check
          _
        $region54: #{tpu_custom_call.1} parent=11 // pred_check_branch
          %241 = sbr.rel target = $region56
        $region55: #{tpu_custom_call.1} parent=11 // pred_region
          %242 = sst [smem:[#allocation13]] [#allocation34]
          %243 = sst [smem:[#allocation14]] [#allocation33]
        $region56: #{tpu_custom_call.1} parent=11 // pred_fallthru
          _
        %245 = shalt.err (0)
        %s247 = sshll.u32 %s237, 4
        %s248 = int_to_ptr.hbm [resolvable:$true] %s247
        %s249 = sshll.u32 %s238, 4
        %s250 = int_to_ptr.vmem [resolvable:$true] %s249
        %252 = dma.hbm_to_vmem [thread:$0]  %s248, 16, %s250, %s239
        %s253 = scalar_lea.hbm %s3, %s236
        %s254 = scalar_lea.vmem [#allocation3], 5
        %s255 = scalar_lea.sflag [#allocation5], 5
        // Predicated region
        $region57: #{tpu_custom_call.1} parent=11 // pred_check
          _
        $region58: #{tpu_custom_call.1} parent=11 // pred_check_branch
          %257 = sbr.rel target = $region60
        $region59: #{tpu_custom_call.1} parent=11 // pred_region
          %258 = sst [smem:[#allocation13]] [#allocation36]
          %259 = sst [smem:[#allocation14]] [#allocation35]
        $region60: #{tpu_custom_call.1} parent=11 // pred_fallthru
          _
        %261 = shalt.err (0)
        %s263 = sshll.u32 %s253, 4
        %s264 = int_to_ptr.hbm [resolvable:$true] %s263
        %s265 = sshll.u32 %s254, 4
        %s266 = int_to_ptr.vmem [resolvable:$true] %s265
        %268 = dma.hbm_to_vmem [thread:$0]  %s264, 16, %s266, %s255
        %s269 = sadd.s32 %s63, 6
        %s270 = sld [smem:[#allocation7 + %s269]]
        %s271 = sld [smem:[#allocation8 + %s269]]
        %s272 = scalar_lea.hbm %s2, %s270
        %s273 = scalar_lea.vmem [#allocation2], 6
        %s274 = scalar_lea.sflag [#allocation4], 6
        // Predicated region
        $region61: #{tpu_custom_call.1} parent=11 // pred_check
          _
        $region62: #{tpu_custom_call.1} parent=11 // pred_check_branch
          %276 = sbr.rel target = $region64
        $region63: #{tpu_custom_call.1} parent=11 // pred_region
          %277 = sst [smem:[#allocation13]] [#allocation38]
          %278 = sst [smem:[#allocation14]] [#allocation37]
        $region64: #{tpu_custom_call.1} parent=11 // pred_fallthru
          _
        %280 = shalt.err (0)
        %s282 = sshll.u32 %s272, 4
        %s283 = int_to_ptr.hbm [resolvable:$true] %s282
        %s284 = sshll.u32 %s273, 4
        %s285 = int_to_ptr.vmem [resolvable:$true] %s284
        %287 = dma.hbm_to_vmem [thread:$0]  %s283, 16, %s285, %s274
        %s288 = scalar_lea.hbm %s3, %s271
        %s289 = scalar_lea.vmem [#allocation3], 6
        %s290 = scalar_lea.sflag [#allocation5], 6
        // Predicated region
        $region65: #{tpu_custom_call.1} parent=11 // pred_check
          _
        $region66: #{tpu_custom_call.1} parent=11 // pred_check_branch
          %292 = sbr.rel target = $region68
        $region67: #{tpu_custom_call.1} parent=11 // pred_region
          %293 = sst [smem:[#allocation13]] [#allocation40]
          %294 = sst [smem:[#allocation14]] [#allocation39]
        $region68: #{tpu_custom_call.1} parent=11 // pred_fallthru
          _
        %296 = shalt.err (0)
        %s298 = sshll.u32 %s288, 4
        %s299 = int_to_ptr.hbm [resolvable:$true] %s298
        %s300 = sshll.u32 %s289, 4
        %s301 = int_to_ptr.vmem [resolvable:$true] %s300
        %303 = dma.hbm_to_vmem [thread:$0]  %s299, 16, %s301, %s290
        %s304 = sadd.s32 %s63, 7
        %s305 = sld [smem:[#allocation7 + %s304]]
        %s306 = sld [smem:[#allocation8 + %s304]]
        %s307 = scalar_lea.hbm %s2, %s305
        %s308 = scalar_lea.vmem [#allocation2], 7
        %s309 = scalar_lea.sflag [#allocation4], 7
        // Predicated region
        $region69: #{tpu_custom_call.1} parent=11 // pred_check
          _
        $region70: #{tpu_custom_call.1} parent=11 // pred_check_branch
          %311 = sbr.rel target = $region72
        $region71: #{tpu_custom_call.1} parent=11 // pred_region
          %312 = sst [smem:[#allocation13]] [#allocation42]
          %313 = sst [smem:[#allocation14]] [#allocation41]
        $region72: #{tpu_custom_call.1} parent=11 // pred_fallthru
          _
        %315 = shalt.err (0)
        %s317 = sshll.u32 %s307, 4
        %s318 = int_to_ptr.hbm [resolvable:$true] %s317
        %s319 = sshll.u32 %s308, 4
        %s320 = int_to_ptr.vmem [resolvable:$true] %s319
        %322 = dma.hbm_to_vmem [thread:$0]  %s318, 16, %s320, %s309
        %s323 = scalar_lea.hbm %s3, %s306
        %s324 = scalar_lea.vmem [#allocation3], 7
        %s325 = scalar_lea.sflag [#allocation5], 7
        // Predicated region
        $region73: #{tpu_custom_call.1} parent=11 // pred_check
          _
        $region74: #{tpu_custom_call.1} parent=11 // pred_check_branch
          %327 = sbr.rel target = $region76
        $region75: #{tpu_custom_call.1} parent=11 // pred_region
          %328 = sst [smem:[#allocation13]] [#allocation44]
          %329 = sst [smem:[#allocation14]] [#allocation43]
        $region76: #{tpu_custom_call.1} parent=11 // pred_fallthru
          _
        %331 = shalt.err (0)
        %s333 = sshll.u32 %s323, 4
        %s334 = int_to_ptr.hbm [resolvable:$true] %s333
        %s335 = sshll.u32 %s324, 4
        %s336 = int_to_ptr.vmem [resolvable:$true] %s335
        %338 = dma.hbm_to_vmem [thread:$0]  %s334, 16, %s336, %s325
        %340 = dma.done [#allocation4], 16
        %342 = dma.done [#allocation5], 16
        %344 = dma.done %s99, 16
        %346 = dma.done %s115, 16
        %348 = dma.done %s134, 16
        %350 = dma.done %s150, 16
        %352 = dma.done %s169, 16
        %354 = dma.done %s185, 16
        %356 = dma.done %s204, 16
        %358 = dma.done %s220, 16
        %360 = dma.done %s239, 16
        %362 = dma.done %s255, 16
        %364 = dma.done %s274, 16
        %366 = dma.done %s290, 16
        %368 = dma.done %s309, 16
        %370 = dma.done %s325, 16
        %v371 = vld [vmem:[#allocation2] sm:$0xff]
        %v372 = vld [vmem:[#allocation3] sm:$0xff]
        %v373 = vadd.f32 %v371, %v372
        %374 = vst [vmem:[%s62] sm:$0xff] %v373
        %s375 = sand.u32 %s35, 1
        %s376 = scalar_lea.sflag [#allocation10], %s375
        %s377 = sand.u32 %s35, 1
        %s378 = smul.addr %s377, 8
        %s379 = scalar_lea.vmem [#allocation9], %s378
        // Predicated region
        $region77: #{tpu_custom_call.1} parent=11 // pred_check
          %p380 = pneg %p41
        $region78: #{tpu_custom_call.1} parent=11 // pred_check_branch
          %382 = sbr.rel (%p380) target = $region80
        $region79: #{tpu_custom_call.1} parent=11 // pred_region
          %384 = vsyncadd %s376, 0
          %s385 = smul.addr %s26, 8
          %s386 = scalar_lea.hbm %s4, %s385
          %s388 = sshll.u32 %s379, 4
          %s389 = int_to_ptr.vmem [resolvable:$true] %s388
          %s390 = sshll.u32 %s386, 4
          %s391 = int_to_ptr.hbm [resolvable:$true] %s390
          %393 = dma.vmem_to_hbm [thread:$0]  %s389, 128, %s391, %s376
        $region80: #{tpu_custom_call.1} parent=11 // pred_fallthru
          _
      $region12: #{tpu_custom_call.1} parent=5 // pred_fallthru
        _
      %p394 = scmp.le.s32.totalorder 1, %s26
      // Predicated region
      $region81: #{tpu_custom_call.1} parent=5 // pred_check
        %p395 = pneg %p394
      $region82: #{tpu_custom_call.1} parent=5 // pred_check_branch
        %397 = sbr.rel (%p395) target = $region84
      $region83: #{tpu_custom_call.1} parent=5 // pred_region
        %s398 = ssub.s32 %s26, 1
        // Predicated region
        $region85: #{tpu_custom_call.1} parent=83 // pred_check
          %p399 = pneg %p47
        $region86: #{tpu_custom_call.1} parent=83 // pred_check_branch
          %401 = sbr.rel (%p399) target = $region88
        $region87: #{tpu_custom_call.1} parent=83 // pred_region
          %s402 = sand.u32 %s38, 1
          %s403 = scalar_lea.sflag [#allocation10], %s402
          %s404 = sand.u32 %s38, 1
          %s405 = smul.addr %s404, 8
          %s406 = scalar_lea.vmem [#allocation9], %s405
          %408 = dma.done %s403, 128
        $region88: #{tpu_custom_call.1} parent=83 // pred_fallthru
          _
      $region84: #{tpu_custom_call.1} parent=5 // pred_fallthru
        _
    $region6: #{tpu_custom_call.1} parent=1 // loop_footer
      %s30 = sadd.s32 1, %s26
    $region7: #{tpu_custom_call.1} parent=1 // loop_footer_branch
      %25 = sbr.rel target = $region3
    $region8: #{tpu_custom_call.1} parent=1 // loop_exit
      _
    %409 = vsyncpa [#allocation10], 1
    %s410 = scalar_lea.sflag [#allocation10], 1
    %411 = vsyncpa %s410, 1
  %412 = vsyncmov [#allocation4]
  %s413 = vpop.sfrf %412
  %p414 = scmp.eq.s32.totalorder %s413, 0
  %p415 = pneg %p414
  %417 = shalt.err (%p415)
  %s418 = scalar_lea.sflag [#allocation4], 1
  %419 = vsyncmov %s418
  %s420 = vpop.sfrf %419
  %p421 = scmp.eq.s32.totalorder %s420, 0
  %p422 = pneg %p421
  %424 = shalt.err (%p422)
  %s425 = scalar_lea.sflag [#allocation4], 2
  %426 = vsyncmov %s425
  %s427 = vpop.sfrf %426
  %p428 = scmp.eq.s32.totalorder %s427, 0
  %p429 = pneg %p428
  %431 = shalt.err (%p429)
  %s432 = scalar_lea.sflag [#allocation4], 3
  %433 = vsyncmov %s432
  %s434 = vpop.sfrf %433
  %p435 = scmp.eq.s32.totalorder %s434, 0
  %p436 = pneg %p435
  %438 = shalt.err (%p436)
  %s439 = scalar_lea.sflag [#allocation4], 4
  %440 = vsyncmov %s439
  %s441 = vpop.sfrf %440
  %p442 = scmp.eq.s32.totalorder %s441, 0
  %p443 = pneg %p442
  %445 = shalt.err (%p443)
  %s446 = scalar_lea.sflag [#allocation4], 5
  %447 = vsyncmov %s446
  %s448 = vpop.sfrf %447
  %p449 = scmp.eq.s32.totalorder %s448, 0
  %p450 = pneg %p449
  %452 = shalt.err (%p450)
  %s453 = scalar_lea.sflag [#allocation4], 6
  %454 = vsyncmov %s453
  %s455 = vpop.sfrf %454
  %p456 = scmp.eq.s32.totalorder %s455, 0
  %p457 = pneg %p456
  %459 = shalt.err (%p457)
  %s460 = scalar_lea.sflag [#allocation4], 7
  %461 = vsyncmov %s460
  %s462 = vpop.sfrf %461
  %p463 = scmp.eq.s32.totalorder %s462, 0
  %p464 = pneg %p463
  %466 = shalt.err (%p464)
  %467 = vsyncmov [#allocation5]
  %s468 = vpop.sfrf %467
  %p469 = scmp.eq.s32.totalorder %s468, 0
  %p470 = pneg %p469
  %472 = shalt.err (%p470)
  %s473 = scalar_lea.sflag [#allocation5], 1
  %474 = vsyncmov %s473
  %s475 = vpop.sfrf %474
  %p476 = scmp.eq.s32.totalorder %s475, 0
  %p477 = pneg %p476
  %479 = shalt.err (%p477)
  %s480 = scalar_lea.sflag [#allocation5], 2
  %481 = vsyncmov %s480
  %s482 = vpop.sfrf %481
  %p483 = scmp.eq.s32.totalorder %s482, 0
  %p484 = pneg %p483
  %486 = shalt.err (%p484)
  %s487 = scalar_lea.sflag [#allocation5], 3
  %488 = vsyncmov %s487
  %s489 = vpop.sfrf %488
  %p490 = scmp.eq.s32.totalorder %s489, 0
  %p491 = pneg %p490
  %493 = shalt.err (%p491)
  %s494 = scalar_lea.sflag [#allocation5], 4
  %495 = vsyncmov %s494
  %s496 = vpop.sfrf %495
  %p497 = scmp.eq.s32.totalorder %s496, 0
  %p498 = pneg %p497
  %500 = shalt.err (%p498)
  %s501 = scalar_lea.sflag [#allocation5], 5
  %502 = vsyncmov %s501
  %s503 = vpop.sfrf %502
  %p504 = scmp.eq.s32.totalorder %s503, 0
  %p505 = pneg %p504
  %507 = shalt.err (%p505)
  %s508 = scalar_lea.sflag [#allocation5], 6
  %509 = vsyncmov %s508
  %s510 = vpop.sfrf %509
  %p511 = scmp.eq.s32.totalorder %s510, 0
  %p512 = pneg %p511
  %514 = shalt.err (%p512)
  %s515 = scalar_lea.sflag [#allocation5], 7
  %516 = vsyncmov %s515
  %s517 = vpop.sfrf %516
  %p518 = scmp.eq.s32.totalorder %s517, 0
  %p519 = pneg %p518
  %521 = shalt.err (%p519)

</llo_original>
